<compile_context>
chip_gen: v7x
topology: tpu7x:2x2x1
jax: 0.10.0
libtpu: 0.0.40
codegen_flags: <defaults>
</compile_context>

<pallas_src>
import functools

import jax
import jax.numpy as jnp
from jax.experimental import pallas as pl
from jax.experimental.pallas import tpu as pltpu

LEAKY_SLOPE = 0.2
BN_EPS = 1e-5
LANE = 128


def _leaky(x):
    return jnp.where(x > 0, x, LEAKY_SLOPE * x)


def _round_up(x, m):
    return (x + m - 1) // m * m


@functools.lru_cache(maxsize=None)
def _tile_config():
    """(max_row_tile, vmem_limit_bytes) per TPU generation."""
    max_rows, vmem_limit = 512, 32 * 1024 * 1024          # v7x-safe default
    try:
        cap = int(getattr(pltpu.get_tpu_info(), "vmem_capacity_bytes", 0))
    except Exception:
        cap = 0
    if cap >= 96 * 1024 * 1024:                           # v5e / v6e: 128 MiB VMEM
        max_rows, vmem_limit = 2048, 64 * 1024 * 1024
    return max_rows, vmem_limit


# ------------------------------ Pallas kernel ------------------------------ #

def _conv_kernel(*refs, offs, tl, num_l, whole_input, emit_stats, epilogue_lrelu):
    """One grid step: TL output rows of one image.

    refs = x, w, [rmask], y, [stats]
      x     : (1, S, 4*Cin) bf16 parity-interleaved input  (whole_input=True)
              (1, TL, 16*Cin) bf16 fully tap-packed input   (whole_input=False)
      w     : (NG, K, Cpad) bf16 resident weights (K = 4*Cin or 16*Cin)
      rmask : (TL, 1) f32, 1.0 on valid output rows (BN statistics only)
      y     : (1, TL, Cpad) bf16 raw conv output (optionally LeakyReLU'd)
      stats : (1, 1, 2, Cpad) f32 per-step (sum, sum_sq)
    """
    it = iter(refs)
    x_ref = next(it)
    w_ref = next(it)
    rmask_ref = next(it) if emit_stats else None
    y_ref = next(it)
    stats_ref = next(it) if emit_stats else None

    if whole_input:
        # Each tap group is a contiguous row-slab of the parity-interleaved
        # tensor at offset {0, 1, wp2, wp2+1}: K = 4*Cin per dot, 4 dots total.
        row0 = 0 if num_l == 1 else pl.program_id(1) * tl
        acc = jnp.zeros(y_ref.shape[1:], jnp.float32)
        for g, off in enumerate(offs):
            slab = x_ref[0, pl.ds(row0 + off, tl), :]          # (TL, 4*Cin) bf16
            acc = acc + jnp.dot(slab, w_ref[g],
                                preferred_element_type=jnp.float32)
    else:
        # All 16 taps packed host-side: single K = 16*Cin matmul.
        acc = jnp.dot(x_ref[0], w_ref[0], preferred_element_type=jnp.float32)

    if emit_stats:
        ym = acc * rmask_ref[...]                              # drop garbage rows
        stats_ref[0, 0] = jnp.concatenate(
            [jnp.sum(ym, axis=0, keepdims=True),
             jnp.sum(ym * ym, axis=0, keepdims=True)], axis=0)  # one (2,Cpad) store

    if epilogue_lrelu:
        acc = jnp.where(acc > 0, acc, LEAKY_SLOPE * acc)
    y_ref[0] = acc.astype(y_ref.dtype)


# ------------------------------ host-side glue ----------------------------- #

def _parity_restructure(a, s_pad, scale=None, shift=None):
    """(N,H,W,C) -> (N, s_pad, 4*C) bf16: zero-pad + parity-interleave channels.

    X[n, a*wp2 + b, (2*pr+pc)*C + c] = padded_input[n, 2a+pr, 2b+pc, c].
    Optionally applies the previous layer's folded BN + LeakyReLU *before* the
    zero padding (fused by XLA into this mandatory layout pass, so no extra HBM
    traffic and the padding stays exactly zero).  Total data volume stays 1x.
    """
    n, h, w, c = a.shape
    if scale is not None:
        a = _leaky(a.astype(jnp.float32) * scale + shift)
    a = a.astype(jnp.bfloat16)
    ho, wo = h // 2, w // 2
    hp2, wp2 = ho + 2, wo + 1
    ap = jnp.pad(a, ((0, 0), (1, 2 * hp2 - h - 1), (1, 2 * wp2 - w - 1), (0, 0)))
    g = ap.reshape(n, hp2, 2, wp2, 2, c).transpose(0, 1, 3, 2, 4, 5)
    g = g.reshape(n, hp2 * wp2, 4 * c)
    if s_pad > hp2 * wp2:
        g = jnp.pad(g, ((0, 0), (0, s_pad - hp2 * wp2), (0, 0)))
    return g


def _prep_weight(w_oihw, cpad, ng):
    """PyTorch (Cout,Cin,4,4) -> (NG, K, Cpad) bf16 matching the packed layout."""
    cout, cin = w_oihw.shape[:2]
    w = jnp.transpose(w_oihw, (2, 3, 1, 0))            # (kh, kw, Cin, Cout)
    w = w.reshape(2, 2, 2, 2, cin, cout)               # (a, pr, b, pc, Cin, Cout)
    w = jnp.transpose(w, (0, 2, 1, 3, 4, 5))           # (a, b, pr, pc, Cin, Cout)
    w = w.reshape(4, 4 * cin, cout)                    # group g = 2*a+b, k = t*Cin+c
    if ng == 1:
        w = w.reshape(1, 16 * cin, cout)
    w = jnp.pad(w, ((0, 0), (0, 0), (0, cpad - cout)))
    return w.astype(jnp.bfloat16)


def conv4x4_s2(a, w_oihw, *, in_scale=None, in_shift=None,
               epilogue_lrelu=False, emit_stats=False):
    """4x4 / stride-2 / pad-1 conv as one Pallas kernel (K-packed MXU matmuls).

    `in_scale`/`in_shift` fold the previous layer's BatchNorm + LeakyReLU into
    the host relayout pass.  `emit_stats` returns per-channel (mean, var) batch
    statistics computed from the f32 accumulator.
    """
    n, h, w, cin = a.shape
    cout = w_oihw.shape[0]
    ho, wo = h // 2, w // 2
    wp2 = wo + 1
    l_rows = ho * wp2                            # flat output rows per image
    cpad = _round_up(cout, LANE)                 # lane-dense output

    max_rows, vmem_limit = _tile_config()
    tl = min(_round_up(l_rows, 16), max_rows)    # bf16-friendly row tiles
    num_l = -(-l_rows // tl)
    lp = tl * num_l

    offs = (0, 1, wp2, wp2 + 1)
    pack_all = (4 * cin) < LANE                  # underfilled K -> pack all 16 taps
    s_pad = max((ho + 2) * wp2, lp + wp2 + 2)    # keep every slab read in-bounds

    x4 = _parity_restructure(a, s_pad, scale=in_scale, shift=in_shift)

    if pack_all:
        x = jnp.concatenate([x4[:, o:o + lp, :] for o in offs], axis=-1)
        ng, k = 1, 16 * cin
        x_spec = pl.BlockSpec((1, tl, k), lambda i, j: (i, j, 0))
    else:
        x = x4
        ng, k = 4, 4 * cin
        x_spec = pl.BlockSpec((1, s_pad, k), lambda i, j: (i, 0, 0))

    wt = _prep_weight(w_oihw, cpad, ng)

    in_specs = [x_spec, pl.BlockSpec((ng, k, cpad), lambda i, j: (0, 0, 0))]
    operands = [x, wt]
    if emit_stats:
        r = jnp.arange(lp)
        rmask = (((r % wp2) < wo) & (r < l_rows)).astype(jnp.float32).reshape(lp, 1)
        in_specs.append(pl.BlockSpec((tl, 1), lambda i, j: (j, 0)))
        operands.append(rmask)

    out_shape = [jax.ShapeDtypeStruct((n, lp, cpad), jnp.bfloat16)]
    out_specs = [pl.BlockSpec((1, tl, cpad), lambda i, j: (i, j, 0))]
    if emit_stats:
        out_shape.append(jax.ShapeDtypeStruct((n, num_l, 2, cpad), jnp.float32))
        out_specs.append(pl.BlockSpec((1, 1, 2, cpad), lambda i, j: (i, j, 0, 0)))

    kern = functools.partial(
        _conv_kernel, offs=offs, tl=tl, num_l=num_l, whole_input=not pack_all,
        emit_stats=emit_stats, epilogue_lrelu=epilogue_lrelu)

    flops = 2 * n * lp * (16 * cin) * cpad
    bytes_accessed = (x.size * x.dtype.itemsize + wt.size * 2 +
                      n * lp * cpad * 2 +
                      (lp * 4 + n * num_l * 2 * cpad * 4 if emit_stats else 0))

    outs = pl.pallas_call(
        kern,
        grid=(n, num_l),
        in_specs=in_specs,
        out_specs=tuple(out_specs),
        out_shape=tuple(out_shape),
        compiler_params=pltpu.CompilerParams(
            dimension_semantics=("parallel", "parallel"),   # megacore-friendly
            vmem_limit_bytes=vmem_limit),
        cost_estimate=pl.CostEstimate(flops=flops, transcendentals=0,
                                      bytes_accessed=bytes_accessed),
    )(*operands)

    y_flat = outs[0]
    # Drop garbage rows / padded lanes: (N, Lp, Cpad) -> (N, Ho, Wo, Cout).
    # Under jit this slice fuses into the next layer's relayout pass.
    y = y_flat[:, :l_rows, :].reshape(n, ho, wp2, cpad)[:, :, :wo, :cout]

    if emit_stats:
        s = jnp.sum(outs[1], axis=(0, 1))                    # (2, Cpad)
        cnt = float(n * ho * wo)
        mean = s[0, :cout] / cnt
        var = jnp.maximum(s[1, :cout] / cnt - mean * mean, 0.0)  # biased, like PyTorch
        return y, (mean, var)
    return y


def _bn_affine(mean, var, gamma, beta):
    """Fold training-mode BatchNorm into a per-channel (scale, shift)."""
    scale = gamma * jax.lax.rsqrt(var + BN_EPS)
    shift = beta - mean * scale
    return scale, shift


def _conv4x4_s2_plain(a, w_oihw):
    """Plain-JAX 4x4/s2/p1 conv (tiny final layer + f32 reference)."""
    n, h, w, c = a.shape
    cout = w_oihw.shape[0]
    ap = jnp.pad(a, ((0, 0), (1, 1), (1, 1), (0, 0)))
    ho, wo = h // 2, w // 2
    cols = [ap[:, kh:kh + 2 * ho:2, kw:kw + 2 * wo:2, :]
            for kh in range(4) for kw in range(4)]
    pat = jnp.concatenate(cols, axis=-1).reshape(n * ho * wo, 16 * c)
    wm = jnp.transpose(w_oihw, (2, 3, 1, 0)).reshape(16 * c, cout)
    return (pat @ wm).reshape(n, ho, wo, cout)


def discriminator_forward(x_nchw, params):
    x = jnp.transpose(x_nchw, (0, 2, 3, 1)).astype(jnp.float32)   # NCHW -> NHWC

    # conv1 + LeakyReLU (fused epilogue)
    a1 = conv4x4_s2(x, params["w1"], epilogue_lrelu=True)

    # conv2 (raw bf16 output) + partial batch stats; BN2 + LeakyReLU are folded
    # into conv3's host relayout pass (training-mode batch statistics).
    y2, (m2, v2) = conv4x4_s2(a1, params["w2"], emit_stats=True)
    s2, b2 = _bn_affine(m2, v2, params["g2"], params["b2"])

    # conv3 with fused (BN2 + LeakyReLU) input transform; raw output + stats.
    y3, (m3, v3) = conv4x4_s2(y2, params["w3"], in_scale=s2, in_shift=b2,
                              emit_stats=True)
    s3, b3 = _bn_affine(m3, v3, params["g3"], params["b3"])

    # BN3 + LeakyReLU + final Conv(->1) + Sigmoid in plain JAX: (M,K)@(K,1)
    # matvec with a 1-lane output; a dedicated Pallas launch is not worth it.
    a3 = _leaky(y3.astype(jnp.float32) * s3 + b3)
    out = jax.nn.sigmoid(_conv4x4_s2_plain(a3, params["w4"]))
    return jnp.transpose(out, (0, 3, 1, 2))                  # NHWC -> NCHW


# ------------------------------- reference --------------------------------- #

def _reference_forward(x_nchw, params):
    """Pure-JAX f32 reference (im2col convs + batch-stat BN)."""
    x = jnp.transpose(x_nchw, (0, 2, 3, 1)).astype(jnp.float32)

    def bn(y, g, b):
        m = jnp.mean(y, axis=(0, 1, 2))
        v = jnp.mean((y - m) ** 2, axis=(0, 1, 2))
        return (y - m) * jax.lax.rsqrt(v + BN_EPS) * g + b

    a = _leaky(_conv4x4_s2_plain(x, params["w1"]))
    a = _leaky(bn(_conv4x4_s2_plain(a, params["w2"]), params["g2"], params["b2"]))
    a = _leaky(bn(_conv4x4_s2_plain(a, params["w3"]), params["g3"], params["b3"]))
    a = jax.nn.sigmoid(_conv4x4_s2_plain(a, params["w4"]))
    return jnp.transpose(a, (0, 3, 1, 2))


# ---------------------------------- params --------------------------------- #

def init_params(key, nc, ndf):
    ks = jax.random.split(key, 4)

    def conv_w(k, cout, cin):
        return 0.02 * jax.random.normal(k, (cout, cin, 4, 4), jnp.float32)

    return {
        "w1": conv_w(ks[0], ndf, nc),
        "w2": conv_w(ks[1], ndf * 2, ndf),
        "g2": jnp.ones((ndf * 2,), jnp.float32),
        "b2": jnp.zeros((ndf * 2,), jnp.float32),
        "w3": conv_w(ks[2], ndf * 4, ndf * 2),
        "g3": jnp.ones((ndf * 4,), jnp.float32),
        "b3": jnp.zeros((ndf * 4,), jnp.float32),
        "w4": conv_w(ks[3], 1, ndf * 4),
    }


# ----------------------------------- main ----------------------------------- #

if __name__ == "__main__":
    # ndf=32 exercises both kernel paths: layer1 -> full 16-tap packing (K=48),
    # layers 2/3 -> parity-group packing (K=128 / K=256).
    nc, ndf = 3, 32
    batch, spatial = 2, 16                  # 16 -> 8 -> 4 -> 2 -> 1 spatial
    key = jax.random.PRNGKey(0)
    k_x, k_p = jax.random.split(key)
    x = jax.random.normal(k_x, (batch, nc, spatial, spatial), jnp.float32)
    params = init_params(k_p, nc, ndf)

    fwd = jax.jit(discriminator_forward)
    out = jax.block_until_ready(fwd(x, params))

    assert out.shape == (batch, 1, 1, 1), out.shape
    assert bool(jnp.all(jnp.isfinite(out)))
    assert bool(jnp.all((out > 0.0) & (out < 1.0)))          # sigmoid range

    ref = _reference_forward(x, params)                      # f32 reference
    assert bool(jnp.allclose(out, ref, atol=5e-2, rtol=0.0)), (out, ref)

    print("KERNEL_OK")
</pallas_src>

<mosaic_0001>
module attributes {stable_mosaic.version = 11 : i64} {
  func.func @_conv_kernel(%arg0: i32, %arg1: i32, %arg2: memref<1x80x48xbf16, #tpu.memory_space<vmem>>, %arg3: memref<1x48x128xbf16, #tpu.memory_space<vmem>>, %arg4: memref<1x80x128xbf16, #tpu.memory_space<vmem>>) attributes {dimension_semantics = [#tpu.dimension_semantics<parallel>, #tpu.dimension_semantics<parallel>], iteration_bounds = array<i64: 2, 1>, scalar_prefetch = 0 : i64, scratch_operands = 0 : i64, tpu.core_type = #tpu.core_type<tc>, window_params = [{transform_indices = @transform_0, window_bounds = array<i64: 1, 80, 48>}, {pipeline_mode = #tpu.pipeline_mode<synchronous>, transform_indices = @transform_1, window_bounds = array<i64: 1, 48, 128>}, {transform_indices = @transform_2, window_bounds = array<i64: 1, 80, 128>}]} {
    %c0 = arith.constant 0 : index
    %c0_0 = arith.constant 0 : index
    %c0_1 = arith.constant 0 : index
    %0 = vector.load %arg2[%c0, %c0_0, %c0_1] : memref<1x80x48xbf16, #tpu.memory_space<vmem>>, vector<1x80x48xbf16>
    %1 = vector.shape_cast %0 : vector<1x80x48xbf16> to vector<80x48xbf16>
    %c0_2 = arith.constant 0 : index
    %c0_3 = arith.constant 0 : index
    %c0_4 = arith.constant 0 : index
    %2 = vector.load %arg3[%c0_2, %c0_3, %c0_4] : memref<1x48x128xbf16, #tpu.memory_space<vmem>>, vector<1x48x128xbf16>
    %3 = vector.shape_cast %2 : vector<1x48x128xbf16> to vector<48x128xbf16>
    %cst = arith.constant dense<0.000000e+00> : vector<80x128xf32>
    %4 = tpu.matmul %1, %3, %cst {dimension_numbers = #tpu.dot_dimension_numbers<[1], [0], [0], [1], [0, 0, 1, 1], [], []>} : vector<80x48xbf16>, vector<48x128xbf16>, vector<80x128xf32> -> vector<80x128xf32>
    %cst_5 = arith.constant 0.000000e+00 : f32
    %5 = vector.broadcast %cst_5 : f32 to vector<80x128xf32>
    %6 = arith.cmpf ogt, %4, %5 : vector<80x128xf32>
    %cst_6 = arith.constant 2.000000e-01 : f32
    %7 = vector.broadcast %cst_6 : f32 to vector<80x128xf32>
    %8 = arith.mulf %7, %4 : vector<80x128xf32>
    %9 = arith.select %6, %4, %8 : vector<80x128xi1>, vector<80x128xf32>
    %10 = arith.truncf %9 : vector<80x128xf32> to vector<80x128xbf16>
    %c0_7 = arith.constant 0 : index
    %c0_8 = arith.constant 0 : index
    %c0_9 = arith.constant 0 : index
    %11 = vector.load %arg4[%c0_7, %c0_8, %c0_9] : memref<1x80x128xbf16, #tpu.memory_space<vmem>>, vector<1x80x128xbf16>
    %12 = vector.shape_cast %11 : vector<1x80x128xbf16> to vector<80x128xbf16>
    %13 = vector.shape_cast %10 : vector<80x128xbf16> to vector<1x80x128xbf16>
    tpu.vector_store %arg4[%c0_7, %c0_8, %c0_9], %13 {strides = array<i32>} : memref<1x80x128xbf16, #tpu.memory_space<vmem>>, vector<1x80x128xbf16>,
    return
  }
  func.func @transform_0(%arg0: i32, %arg1: i32) -> (i32, i32, i32) {
    %c0_i32 = arith.constant 0 : i32
    %c0_i32_0 = arith.constant 0 : i32
    return %arg0, %arg1, %c0_i32 : i32, i32, i32
  }
  func.func @transform_1(%arg0: i32, %arg1: i32) -> (i32, i32, i32) {
    %c0_i32 = arith.constant 0 : i32
    %c0_i32_0 = arith.constant 0 : i32
    %c0_i32_1 = arith.constant 0 : i32
    %c0_i32_2 = arith.constant 0 : i32
    return %c0_i32, %c0_i32_0, %c0_i32_1 : i32, i32, i32
  }
  func.func @transform_2(%arg0: i32, %arg1: i32) -> (i32, i32, i32) {
    %c0_i32 = arith.constant 0 : i32
    %c0_i32_0 = arith.constant 0 : i32
    return %arg0, %arg1, %c0_i32 : i32, i32, i32
  }
}

module attributes {stable_mosaic.version = 11 : i64} {
  func.func @_conv_kernel(%arg0: i32, %arg1: i32, %arg2: memref<1x39x128xbf16, #tpu.memory_space<vmem>>, %arg3: memref<4x128x128xbf16, #tpu.memory_space<vmem>>, %arg4: memref<32x1xf32, #tpu.memory_space<vmem>>, %arg5: memref<1x32x128xbf16, #tpu.memory_space<vmem>>, %arg6: memref<1x1x2x128xf32, #tpu.memory_space<vmem>>) attributes {dimension_semantics = [#tpu.dimension_semantics<parallel>, #tpu.dimension_semantics<parallel>], iteration_bounds = array<i64: 2, 1>, scalar_prefetch = 0 : i64, scratch_operands = 0 : i64, tpu.core_type = #tpu.core_type<tc>, window_params = [{transform_indices = @transform_0, window_bounds = array<i64: 1, 39, 128>}, {pipeline_mode = #tpu.pipeline_mode<synchronous>, transform_indices = @transform_1, window_bounds = array<i64: 4, 128, 128>}, {transform_indices = @transform_2, window_bounds = array<i64: 32, 1>}, {transform_indices = @transform_3, window_bounds = array<i64: 1, 32, 128>}, {transform_indices = @transform_4, window_bounds = array<i64: 1, 1, 2, 128>}]} {
    %cst = arith.constant 0.000000e+00 : f32
    %0 = vector.broadcast %cst : f32 to vector<32x128xf32>
    %c0 = arith.constant 0 : index
    %c0_0 = arith.constant 0 : index
    %c0_1 = arith.constant 0 : index
    %1 = vector.load %arg2[%c0, %c0_0, %c0_1] : memref<1x39x128xbf16, #tpu.memory_space<vmem>>, vector<1x32x128xbf16>
    %2 = vector.shape_cast %1 : vector<1x32x128xbf16> to vector<32x128xbf16>
    %c0_2 = arith.constant 0 : index
    %c0_3 = arith.constant 0 : index
    %c0_4 = arith.constant 0 : index
    %3 = vector.load %arg3[%c0_2, %c0_3, %c0_4] : memref<4x128x128xbf16, #tpu.memory_space<vmem>>, vector<1x128x128xbf16>
    %4 = vector.shape_cast %3 : vector<1x128x128xbf16> to vector<128x128xbf16>
    %cst_5 = arith.constant dense<0.000000e+00> : vector<32x128xf32>
    %5 = tpu.matmul %2, %4, %cst_5 {dimension_numbers = #tpu.dot_dimension_numbers<[1], [0], [0], [1], [0, 0, 1, 1], [], []>} : vector<32x128xbf16>, vector<128x128xbf16>, vector<32x128xf32> -> vector<32x128xf32>
    %6 = arith.addf %0, %5 : vector<32x128xf32>
    %c0_6 = arith.constant 0 : index
    %c1 = arith.constant 1 : index
    %c0_7 = arith.constant 0 : index
    %7 = vector.load %arg2[%c0_6, %c1, %c0_7] : memref<1x39x128xbf16, #tpu.memory_space<vmem>>, vector<1x32x128xbf16>
    %8 = vector.shape_cast %7 : vector<1x32x128xbf16> to vector<32x128xbf16>
    %c1_8 = arith.constant 1 : index
    %c0_9 = arith.constant 0 : index
    %c0_10 = arith.constant 0 : index
    %9 = vector.load %arg3[%c1_8, %c0_9, %c0_10] : memref<4x128x128xbf16, #tpu.memory_space<vmem>>, vector<1x128x128xbf16>
    %10 = vector.shape_cast %9 : vector<1x128x128xbf16> to vector<128x128xbf16>
    %cst_11 = arith.constant dense<0.000000e+00> : vector<32x128xf32>
    %11 = tpu.matmul %8, %10, %cst_11 {dimension_numbers = #tpu.dot_dimension_numbers<[1], [0], [0], [1], [0, 0, 1, 1], [], []>} : vector<32x128xbf16>, vector<128x128xbf16>, vector<32x128xf32> -> vector<32x128xf32>
    %12 = arith.addf %6, %11 : vector<32x128xf32>
    %c0_12 = arith.constant 0 : index
    %c5 = arith.constant 5 : index
    %c0_13 = arith.constant 0 : index
    %13 = vector.load %arg2[%c0_12, %c5, %c0_13] : memref<1x39x128xbf16, #tpu.memory_space<vmem>>, vector<1x32x128xbf16>
    %14 = vector.shape_cast %13 : vector<1x32x128xbf16> to vector<32x128xbf16>
    %c2 = arith.constant 2 : index
    %c0_14 = arith.constant 0 : index
    %c0_15 = arith.constant 0 : index
    %15 = vector.load %arg3[%c2, %c0_14, %c0_15] : memref<4x128x128xbf16, #tpu.memory_space<vmem>>, vector<1x128x128xbf16>
    %16 = vector.shape_cast %15 : vector<1x128x128xbf16> to vector<128x128xbf16>
    %cst_16 = arith.constant dense<0.000000e+00> : vector<32x128xf32>
    %17 = tpu.matmul %14, %16, %cst_16 {dimension_numbers = #tpu.dot_dimension_numbers<[1], [0], [0], [1], [0, 0, 1, 1], [], []>} : vector<32x128xbf16>, vector<128x128xbf16>, vector<32x128xf32> -> vector<32x128xf32>
    %18 = arith.addf %12, %17 : vector<32x128xf32>
    %c0_17 = arith.constant 0 : index
    %c6 = arith.constant 6 : index
    %c0_18 = arith.constant 0 : index
    %19 = vector.load %arg2[%c0_17, %c6, %c0_18] : memref<1x39x128xbf16, #tpu.memory_space<vmem>>, vector<1x32x128xbf16>
    %20 = vector.shape_cast %19 : vector<1x32x128xbf16> to vector<32x128xbf16>
    %c3 = arith.constant 3 : index
    %c0_19 = arith.constant 0 : index
    %c0_20 = arith.constant 0 : index
    %21 = vector.load %arg3[%c3, %c0_19, %c0_20] : memref<4x128x128xbf16, #tpu.memory_space<vmem>>, vector<1x128x128xbf16>
    %22 = vector.shape_cast %21 : vector<1x128x128xbf16> to vector<128x128xbf16>
    %cst_21 = arith.constant dense<0.000000e+00> : vector<32x128xf32>
    %23 = tpu.matmul %20, %22, %cst_21 {dimension_numbers = #tpu.dot_dimension_numbers<[1], [0], [0], [1], [0, 0, 1, 1], [], []>} : vector<32x128xbf16>, vector<128x128xbf16>, vector<32x128xf32> -> vector<32x128xf32>
    %24 = arith.addf %18, %23 : vector<32x128xf32>
    %c0_22 = arith.constant 0 : index
    %c0_23 = arith.constant 0 : index
    %25 = vector.load %arg4[%c0_22, %c0_23] : memref<32x1xf32, #tpu.memory_space<vmem>>, vector<32x1xf32>
    %26 = vector.broadcast %25 : vector<32x1xf32> to vector<32x128xf32>
    %27 = arith.mulf %24, %26 : vector<32x128xf32>
    %cst_24 = arith.constant dense<0.000000e+00> : vector<128xf32>
    %28 = vector.multi_reduction <add>, %27, %cst_24 [0] : vector<32x128xf32> to vector<128xf32>
    %29 = vector.shape_cast %28 : vector<128xf32> to vector<1x128xf32>
    %30 = arith.mulf %27, %27 : vector<32x128xf32>
    %cst_25 = arith.constant dense<0.000000e+00> : vector<128xf32>
    %31 = vector.multi_reduction <add>, %30, %cst_25 [0] : vector<32x128xf32> to vector<128xf32>
    %32 = vector.shape_cast %31 : vector<128xf32> to vector<1x128xf32>
    %33 = tpu.concatenate %29, %32 in 0 : vector<1x128xf32>, vector<1x128xf32> -> vector<2x128xf32>
    %c0_26 = arith.constant 0 : index
    %c0_27 = arith.constant 0 : index
    %c0_28 = arith.constant 0 : index
    %c0_29 = arith.constant 0 : index
    %34 = vector.load %arg6[%c0_26, %c0_27, %c0_28, %c0_29] : memref<1x1x2x128xf32, #tpu.memory_space<vmem>>, vector<1x1x2x128xf32>
    %35 = vector.shape_cast %34 : vector<1x1x2x128xf32> to vector<2x128xf32>
    %36 = vector.shape_cast %33 : vector<2x128xf32> to vector<1x1x2x128xf32>
    tpu.vector_store %arg6[%c0_26, %c0_27, %c0_28, %c0_29], %36 {strides = array<i32>} : memref<1x1x2x128xf32, #tpu.memory_space<vmem>>, vector<1x1x2x128xf32>,
    %37 = arith.truncf %24 : vector<32x128xf32> to vector<32x128xbf16>
    %c0_30 = arith.constant 0 : index
    %c0_31 = arith.constant 0 : index
    %c0_32 = arith.constant 0 : index
    %38 = vector.load %arg5[%c0_30, %c0_31, %c0_32] : memref<1x32x128xbf16, #tpu.memory_space<vmem>>, vector<1x32x128xbf16>
    %39 = vector.shape_cast %38 : vector<1x32x128xbf16> to vector<32x128xbf16>
    %40 = vector.shape_cast %37 : vector<32x128xbf16> to vector<1x32x128xbf16>
    tpu.vector_store %arg5[%c0_30, %c0_31, %c0_32], %40 {strides = array<i32>} : memref<1x32x128xbf16, #tpu.memory_space<vmem>>, vector<1x32x128xbf16>,
    return
  }
  func.func @transform_0(%arg0: i32, %arg1: i32) -> (i32, i32, i32) {
    %c0_i32 = arith.constant 0 : i32
    %c0_i32_0 = arith.constant 0 : i32
    %c0_i32_1 = arith.constant 0 : i32
    return %arg0, %c0_i32, %c0_i32_0 : i32, i32, i32
  }
  func.func @transform_1(%arg0: i32, %arg1: i32) -> (i32, i32, i32) {
    %c0_i32 = arith.constant 0 : i32
    %c0_i32_0 = arith.constant 0 : i32
    %c0_i32_1 = arith.constant 0 : i32
    %c0_i32_2 = arith.constant 0 : i32
    return %c0_i32, %c0_i32_0, %c0_i32_1 : i32, i32, i32
  }
  func.func @transform_2(%arg0: i32, %arg1: i32) -> (i32, i32) {
    %c0_i32 = arith.constant 0 : i32
    %c0_i32_0 = arith.constant 0 : i32
    return %arg1, %c0_i32 : i32, i32
  }
  func.func @transform_3(%arg0: i32, %arg1: i32) -> (i32, i32, i32) {
    %c0_i32 = arith.constant 0 : i32
    %c0_i32_0 = arith.constant 0 : i32
    return %arg0, %arg1, %c0_i32 : i32, i32, i32
  }
  func.func @transform_4(%arg0: i32, %arg1: i32) -> (i32, i32, i32, i32) {
    %c0_i32 = arith.constant 0 : i32
    %c0_i32_0 = arith.constant 0 : i32
    %c0_i32_1 = arith.constant 0 : i32
    return %arg0, %arg1, %c0_i32, %c0_i32_0 : i32, i32, i32, i32
  }
}

module attributes {stable_mosaic.version = 11 : i64} {
  func.func @_conv_kernel(%arg0: i32, %arg1: i32, %arg2: memref<1x21x256xbf16, #tpu.memory_space<vmem>>, %arg3: memref<4x256x128xbf16, #tpu.memory_space<vmem>>, %arg4: memref<16x1xf32, #tpu.memory_space<vmem>>, %arg5: memref<1x16x128xbf16, #tpu.memory_space<vmem>>, %arg6: memref<1x1x2x128xf32, #tpu.memory_space<vmem>>) attributes {dimension_semantics = [#tpu.dimension_semantics<parallel>, #tpu.dimension_semantics<parallel>], iteration_bounds = array<i64: 2, 1>, scalar_prefetch = 0 : i64, scratch_operands = 0 : i64, tpu.core_type = #tpu.core_type<tc>, window_params = [{transform_indices = @transform_0, window_bounds = array<i64: 1, 21, 256>}, {pipeline_mode = #tpu.pipeline_mode<synchronous>, transform_indices = @transform_1, window_bounds = array<i64: 4, 256, 128>}, {transform_indices = @transform_2, window_bounds = array<i64: 16, 1>}, {transform_indices = @transform_3, window_bounds = array<i64: 1, 16, 128>}, {transform_indices = @transform_4, window_bounds = array<i64: 1, 1, 2, 128>}]} {
    %cst = arith.constant 0.000000e+00 : f32
    %0 = vector.broadcast %cst : f32 to vector<16x128xf32>
    %c0 = arith.constant 0 : index
    %c0_0 = arith.constant 0 : index
    %c0_1 = arith.constant 0 : index
    %1 = vector.load %arg2[%c0, %c0_0, %c0_1] : memref<1x21x256xbf16, #tpu.memory_space<vmem>>, vector<1x16x256xbf16>
    %2 = vector.shape_cast %1 : vector<1x16x256xbf16> to vector<16x256xbf16>
    %c0_2 = arith.constant 0 : index
    %c0_3 = arith.constant 0 : index
    %c0_4 = arith.constant 0 : index
    %3 = vector.load %arg3[%c0_2, %c0_3, %c0_4] : memref<4x256x128xbf16, #tpu.memory_space<vmem>>, vector<1x256x128xbf16>
    %4 = vector.shape_cast %3 : vector<1x256x128xbf16> to vector<256x128xbf16>
    %cst_5 = arith.constant dense<0.000000e+00> : vector<16x128xf32>
    %5 = tpu.matmul %2, %4, %cst_5 {dimension_numbers = #tpu.dot_dimension_numbers<[1], [0], [0], [1], [0, 0, 1, 1], [], []>} : vector<16x256xbf16>, vector<256x128xbf16>, vector<16x128xf32> -> vector<16x128xf32>
    %6 = arith.addf %0, %5 : vector<16x128xf32>
    %c0_6 = arith.constant 0 : index
    %c1 = arith.constant 1 : index
    %c0_7 = arith.constant 0 : index
    %7 = vector.load %arg2[%c0_6, %c1, %c0_7] : memref<1x21x256xbf16, #tpu.memory_space<vmem>>, vector<1x16x256xbf16>
    %8 = vector.shape_cast %7 : vector<1x16x256xbf16> to vector<16x256xbf16>
    %c1_8 = arith.constant 1 : index
    %c0_9 = arith.constant 0 : index
    %c0_10 = arith.constant 0 : index
    %9 = vector.load %arg3[%c1_8, %c0_9, %c0_10] : memref<4x256x128xbf16, #tpu.memory_space<vmem>>, vector<1x256x128xbf16>
    %10 = vector.shape_cast %9 : vector<1x256x128xbf16> to vector<256x128xbf16>
    %cst_11 = arith.constant dense<0.000000e+00> : vector<16x128xf32>
    %11 = tpu.matmul %8, %10, %cst_11 {dimension_numbers = #tpu.dot_dimension_numbers<[1], [0], [0], [1], [0, 0, 1, 1], [], []>} : vector<16x256xbf16>, vector<256x128xbf16>, vector<16x128xf32> -> vector<16x128xf32>
    %12 = arith.addf %6, %11 : vector<16x128xf32>
    %c0_12 = arith.constant 0 : index
    %c3 = arith.constant 3 : index
    %c0_13 = arith.constant 0 : index
    %13 = vector.load %arg2[%c0_12, %c3, %c0_13] : memref<1x21x256xbf16, #tpu.memory_space<vmem>>, vector<1x16x256xbf16>
    %14 = vector.shape_cast %13 : vector<1x16x256xbf16> to vector<16x256xbf16>
    %c2 = arith.constant 2 : index
    %c0_14 = arith.constant 0 : index
    %c0_15 = arith.constant 0 : index
    %15 = vector.load %arg3[%c2, %c0_14, %c0_15] : memref<4x256x128xbf16, #tpu.memory_space<vmem>>, vector<1x256x128xbf16>
    %16 = vector.shape_cast %15 : vector<1x256x128xbf16> to vector<256x128xbf16>
    %cst_16 = arith.constant dense<0.000000e+00> : vector<16x128xf32>
    %17 = tpu.matmul %14, %16, %cst_16 {dimension_numbers = #tpu.dot_dimension_numbers<[1], [0], [0], [1], [0, 0, 1, 1], [], []>} : vector<16x256xbf16>, vector<256x128xbf16>, vector<16x128xf32> -> vector<16x128xf32>
    %18 = arith.addf %12, %17 : vector<16x128xf32>
    %c0_17 = arith.constant 0 : index
    %c4 = arith.constant 4 : index
    %c0_18 = arith.constant 0 : index
    %19 = vector.load %arg2[%c0_17, %c4, %c0_18] : memref<1x21x256xbf16, #tpu.memory_space<vmem>>, vector<1x16x256xbf16>
    %20 = vector.shape_cast %19 : vector<1x16x256xbf16> to vector<16x256xbf16>
    %c3_19 = arith.constant 3 : index
    %c0_20 = arith.constant 0 : index
    %c0_21 = arith.constant 0 : index
    %21 = vector.load %arg3[%c3_19, %c0_20, %c0_21] : memref<4x256x128xbf16, #tpu.memory_space<vmem>>, vector<1x256x128xbf16>
    %22 = vector.shape_cast %21 : vector<1x256x128xbf16> to vector<256x128xbf16>
    %cst_22 = arith.constant dense<0.000000e+00> : vector<16x128xf32>
    %23 = tpu.matmul %20, %22, %cst_22 {dimension_numbers = #tpu.dot_dimension_numbers<[1], [0], [0], [1], [0, 0, 1, 1], [], []>} : vector<16x256xbf16>, vector<256x128xbf16>, vector<16x128xf32> -> vector<16x128xf32>
    %24 = arith.addf %18, %23 : vector<16x128xf32>
    %c0_23 = arith.constant 0 : index
    %c0_24 = arith.constant 0 : index
    %25 = vector.load %arg4[%c0_23, %c0_24] : memref<16x1xf32, #tpu.memory_space<vmem>>, vector<16x1xf32>
    %26 = vector.broadcast %25 : vector<16x1xf32> to vector<16x128xf32>
    %27 = arith.mulf %24, %26 : vector<16x128xf32>
    %cst_25 = arith.constant dense<0.000000e+00> : vector<128xf32>
    %28 = vector.multi_reduction <add>, %27, %cst_25 [0] : vector<16x128xf32> to vector<128xf32>
    %29 = vector.shape_cast %28 : vector<128xf32> to vector<1x128xf32>
    %30 = arith.mulf %27, %27 : vector<16x128xf32>
    %cst_26 = arith.constant dense<0.000000e+00> : vector<128xf32>
    %31 = vector.multi_reduction <add>, %30, %cst_26 [0] : vector<16x128xf32> to vector<128xf32>
    %32 = vector.shape_cast %31 : vector<128xf32> to vector<1x128xf32>
    %33 = tpu.concatenate %29, %32 in 0 : vector<1x128xf32>, vector<1x128xf32> -> vector<2x128xf32>
    %c0_27 = arith.constant 0 : index
    %c0_28 = arith.constant 0 : index
    %c0_29 = arith.constant 0 : index
    %c0_30 = arith.constant 0 : index
    %34 = vector.load %arg6[%c0_27, %c0_28, %c0_29, %c0_30] : memref<1x1x2x128xf32, #tpu.memory_space<vmem>>, vector<1x1x2x128xf32>
    %35 = vector.shape_cast %34 : vector<1x1x2x128xf32> to vector<2x128xf32>
    %36 = vector.shape_cast %33 : vector<2x128xf32> to vector<1x1x2x128xf32>
    tpu.vector_store %arg6[%c0_27, %c0_28, %c0_29, %c0_30], %36 {strides = array<i32>} : memref<1x1x2x128xf32, #tpu.memory_space<vmem>>, vector<1x1x2x128xf32>,
    %37 = arith.truncf %24 : vector<16x128xf32> to vector<16x128xbf16>
    %c0_31 = arith.constant 0 : index
    %c0_32 = arith.constant 0 : index
    %c0_33 = arith.constant 0 : index
    %38 = vector.load %arg5[%c0_31, %c0_32, %c0_33] : memref<1x16x128xbf16, #tpu.memory_space<vmem>>, vector<1x16x128xbf16>
    %39 = vector.shape_cast %38 : vector<1x16x128xbf16> to vector<16x128xbf16>
    %40 = vector.shape_cast %37 : vector<16x128xbf16> to vector<1x16x128xbf16>
    tpu.vector_store %arg5[%c0_31, %c0_32, %c0_33], %40 {strides = array<i32>} : memref<1x16x128xbf16, #tpu.memory_space<vmem>>, vector<1x16x128xbf16>,
    return
  }
  func.func @transform_0(%arg0: i32, %arg1: i32) -> (i32, i32, i32) {
    %c0_i32 = arith.constant 0 : i32
    %c0_i32_0 = arith.constant 0 : i32
    %c0_i32_1 = arith.constant 0 : i32
    return %arg0, %c0_i32, %c0_i32_0 : i32, i32, i32
  }
  func.func @transform_1(%arg0: i32, %arg1: i32) -> (i32, i32, i32) {
    %c0_i32 = arith.constant 0 : i32
    %c0_i32_0 = arith.constant 0 : i32
    %c0_i32_1 = arith.constant 0 : i32
    %c0_i32_2 = arith.constant 0 : i32
    return %c0_i32, %c0_i32_0, %c0_i32_1 : i32, i32, i32
  }
  func.func @transform_2(%arg0: i32, %arg1: i32) -> (i32, i32) {
    %c0_i32 = arith.constant 0 : i32
    %c0_i32_0 = arith.constant 0 : i32
    return %arg1, %c0_i32 : i32, i32
  }
  func.func @transform_3(%arg0: i32, %arg1: i32) -> (i32, i32, i32) {
    %c0_i32 = arith.constant 0 : i32
    %c0_i32_0 = arith.constant 0 : i32
    return %arg0, %arg1, %c0_i32 : i32, i32, i32
  }
  func.func @transform_4(%arg0: i32, %arg1: i32) -> (i32, i32, i32, i32) {
    %c0_i32 = arith.constant 0 : i32
    %c0_i32_0 = arith.constant 0 : i32
    %c0_i32_1 = arith.constant 0 : i32
    return %arg0, %arg1, %c0_i32, %c0_i32_0 : i32, i32, i32, i32
  }
}

</mosaic_0001>

<llo_original>
// kernel: discriminator_forward.3
$region0: #{discriminator_forward.3}
  #allocation0 [shape = 'u32[]', space=smem, size = 0x4, offset = 0x4, fixed_abs, tag = 'smem constant byte address 0x4 - core index']
  #allocation1 [shape = 'u32[144,128]{1,0:T(1,128)}', space=vmem, size = 0x12000, scoped, tag = 'internal scratch']
  %s0 = inlined_call_operand.vmem [shape: bf16[2,80,48], index: 0, kind: input, shape index: {}]
  %s1 = inlined_call_operand.vmem [shape: bf16[1,48,128], index: 1, kind: input, shape index: {}]
  %s2 = inlined_call_operand.vmem [shape: bf16[2,80,128], index: 2, kind: output, shape index: {}]
  %s3 = sld [smem:[#allocation0]]
  $region41: #{discriminator_forward.3} parent=0
    _
  %s5 = ssub.s32 1, %s3
  %s6 = scalar_select 0, %s5, %s3
  loop: start=0, step=1, limit=4
  $region2: #{discriminator_forward.3} parent=0 // loop_pre_header
    _
  $region3: #{discriminator_forward.3} parent=0 // loop_header
    %s8 = sphi 0, %s12
    %p9 = scmp.ge.s32.totalorder %s8, 4
    %s15 = sphi 0, %s27
    %s16 = sphi 0, %s23
    %s17 = sphi 0, %s15
    %s18 = sphi 0, %s16
    %s19 = sphi 0, %s17
    %s20 = sphi 0, %s18
    %s32 = sphi 0, %s34
    %s35 = sphi 0, %s32
    %s36 = sphi 0, %s35
    %s52 = sphi 0, %s36
    %s56 = sphi 0, %s56
    %s58 = sphi 0, %s56
    %s59 = sphi 0, %s58
    %s73 = sphi 0, %s59
    %s81 = sphi 0, %s83
    %s84 = sphi 0, %s81
    %s85 = sphi 0, %s84
    %s101 = sphi 0, %s85
  $region4: #{discriminator_forward.3} parent=0 // loop_header_branch
    %11 = sbr.rel (%p9) target = $region8
  $region5: #{discriminator_forward.3} parent=0 // loop_body
    %s13 = ssub.s32 %s8, 1
    %s14 = ssub.s32 %s8, 2
    %s21 = sadd.s32 1, %s16
    %p22 = scmp.ge.s32.totalorder %s21, 1
    %s23 = scalar_select %p22, 0, %s21
    %s24 = sadd.s32 1, %s15
    %s25 = scalar_select %p22, %s24, %s15
    %p26 = scmp.ge.s32.totalorder %s25, 2
    %s27 = scalar_select %p26, 0, %s25
    %s28 = ssub.s32 %s15, %s27
    %s29 = ssub.s32 %s16, %s23
    %s30 = sor.u32 %s28, %s29
    %p31 = scmp.eq.s32.totalorder %s30, 0
    %s33 = sadd.s32 %s32, 1
    %s34 = scalar_select %p31, %s32, %s33
    %p37 = pneg %p31
    %p38 = scmp.eq.s32.totalorder %s8, 1
    %p39 = por %p37, %p38
    %p40 = scmp.ne.s32.totalorder %s32, %s35
    %p41 = scmp.eq.s32.totalorder %s8, 0
    %p42 = por %p40, %p41
    %p43 = scmp.ne.s32.totalorder %s32, %s35
    %p44 = scmp.eq.s32.totalorder %s13, 1
    %p45 = por %p43, %p44
    %p46 = scmp.ne.s32.totalorder %s35, %s36
    %p47 = scmp.eq.s32.totalorder %s13, 0
    %p48 = por %p46, %p47
    %p49 = scmp.ne.s32.totalorder %s35, %s36
    %p50 = scmp.eq.s32.totalorder %s14, 1
    %p51 = por %p49, %p50
    %p53 = scmp.ne.s32.totalorder %s36, %s52
    %p54 = scmp.eq.s32.totalorder %s14, 0
    %p55 = por %p53, %p54
    %s57 = sadd.s32 %s56, 1
    %p60 = scmp.eq.s32.totalorder %s8, 1
    %p61 = scmp.ne.s32.totalorder %s56, %s58
    %p62 = scmp.eq.s32.totalorder %s8, 0
    %p63 = por %p61, %p62
    %p64 = scmp.ne.s32.totalorder %s56, %s58
    %p65 = scmp.eq.s32.totalorder %s13, 1
    %p66 = por %p64, %p65
    %p67 = scmp.ne.s32.totalorder %s58, %s59
    %p68 = scmp.eq.s32.totalorder %s13, 0
    %p69 = por %p67, %p68
    %p70 = scmp.ne.s32.totalorder %s58, %s59
    %p71 = scmp.eq.s32.totalorder %s14, 1
    %p72 = por %p70, %p71
    %p74 = scmp.ne.s32.totalorder %s59, %s73
    %p75 = scmp.eq.s32.totalorder %s14, 0
    %p76 = por %p74, %p75
    %s77 = ssub.s32 %s15, %s27
    %s78 = ssub.s32 %s16, %s23
    %s79 = sor.u32 %s77, %s78
    %p80 = scmp.eq.s32.totalorder %s79, 0
    %s82 = sadd.s32 %s81, 1
    %s83 = scalar_select %p80, %s81, %s82
    %p86 = pneg %p80
    %p87 = scmp.eq.s32.totalorder %s8, 1
    %p88 = por %p86, %p87
    %p89 = scmp.ne.s32.totalorder %s81, %s84
    %p90 = scmp.eq.s32.totalorder %s8, 0
    %p91 = por %p89, %p90
    %p92 = scmp.ne.s32.totalorder %s81, %s84
    %p93 = scmp.eq.s32.totalorder %s13, 1
    %p94 = por %p92, %p93
    %p95 = scmp.ne.s32.totalorder %s84, %s85
    %p96 = scmp.eq.s32.totalorder %s13, 0
    %p97 = por %p95, %p96
    %p98 = scmp.ne.s32.totalorder %s84, %s85
    %p99 = scmp.eq.s32.totalorder %s14, 1
    %p100 = por %p98, %p99
    %p102 = scmp.ne.s32.totalorder %s85, %s101
    %p103 = scmp.eq.s32.totalorder %s14, 0
    %p104 = por %p102, %p103
    %p105 = scmp.le.s32.totalorder 1, %s8
    %p106 = scmp.lt.s32.totalorder %s8, 3
    %p107 = pnand %p105, %p106
    %p108 = pneg %p107
    // Predicated region
    $region9: #{discriminator_forward.3} parent=5 // pred_check
      _
    $region10: #{discriminator_forward.3} parent=5 // pred_check_branch
      %110 = sbr.rel (%p107) target = $region12
    $region11: #{discriminator_forward.3} parent=5 // pred_region
      %s111 = ssub.s32 %s8, 1
      // Predicated region
      $region13: #{discriminator_forward.3} parent=11 // pred_check
        %p112 = pneg %p69
      $region14: #{discriminator_forward.3} parent=11 // pred_check_branch
        %114 = sbr.rel (%p112) target = $region16
      $region15: #{discriminator_forward.3} parent=11 // pred_region
        _
      $region16: #{discriminator_forward.3} parent=11 // pred_fallthru
        _
    $region12: #{discriminator_forward.3} parent=5 // pred_fallthru
      _
    %p115 = scmp.lt.s32.totalorder %s8, 2
    // Predicated region
    $region17: #{discriminator_forward.3} parent=5 // pred_check
      %p116 = pneg %p115
    $region18: #{discriminator_forward.3} parent=5 // pred_check_branch
      %118 = sbr.rel (%p116) target = $region20
    $region19: #{discriminator_forward.3} parent=5 // pred_region
      // Predicated region
      $region21: #{discriminator_forward.3} parent=19 // pred_check
        %p119 = pneg %p42
      $region22: #{discriminator_forward.3} parent=19 // pred_check_branch
        %121 = sbr.rel (%p119) target = $region24
      $region23: #{discriminator_forward.3} parent=19 // pred_region
        %s122 = smul.u32 10, %s16
        %p123 = scmp.lt.s32.totalorder %s15, 1
        %s124 = scalar_select %p123, %s15, 1
        %p125 = scmp.lt.s32.totalorder %s122, 9
        %s126 = scalar_select %p125, %s122, 9
        %s127 = smul.addr %s124, 10
        %s128 = sadd.s32 %s126, %s127
        %s129 = smul.addr %s128, 4
        %s130 = scalar_lea.vmem %s0, %s129
        %s131 = smul.u32 10, %s16
      $region24: #{discriminator_forward.3} parent=19 // pred_fallthru
        _
    $region20: #{discriminator_forward.3} parent=5 // pred_fallthru
      _
    %p132 = scmp.le.s32.totalorder 1, %s8
    %p133 = scmp.lt.s32.totalorder %s8, 3
    %p134 = pnand %p132, %p133
    %p135 = pneg %p134
    // Predicated region
    $region25: #{discriminator_forward.3} parent=5 // pred_check
      _
    $region26: #{discriminator_forward.3} parent=5 // pred_check_branch
      %137 = sbr.rel (%p134) target = $region28
    $region27: #{discriminator_forward.3} parent=5 // pred_region
      %s138 = ssub.s32 %s8, 1
      %s139 = smul.u32 10, %s18
      %p140 = scmp.lt.s32.totalorder %s17, 1
      %s141 = scalar_select %p140, %s17, 1
      %p142 = scmp.lt.s32.totalorder %s139, 9
      %s143 = scalar_select %p142, %s139, 9
      %s144 = smul.addr %s141, 10
      %s145 = sadd.s32 %s143, %s144
      %s146 = smul.addr %s145, 4
      %s147 = scalar_lea.vmem %s0, %s146
      %p148 = pneg %p48
      %p149 = pneg %p45
      %p150 = pneg %p69
      %p151 = pneg %p66
      %p152 = pneg %p97
      %p153 = pneg %p94
      %s154 = smul.u32 10, %s18
      %p155 = scmp.lt.s32.totalorder %s17, 1
      %s156 = scalar_select %p155, %s17, 1
      %p157 = scmp.lt.s32.totalorder %s154, 9
      %s158 = scalar_select %p157, %s154, 9
      %s159 = smul.addr %s156, 10
      %s160 = sadd.s32 %s158, %s159
      %s161 = smul.addr %s160, 4
      %s162 = scalar_lea.vmem %s2, %s161
      %s163 = smul.u32 10, %s18
      %p164 = scmp.lt.s32.totalorder %s17, 1
      %s165 = scalar_select %p164, %s17, 1
      %p166 = scmp.lt.s32.totalorder %s163, 9
      %s167 = scalar_select %p166, %s163, 9
      %s168 = smul.addr %s165, 10
      %s169 = sadd.s32 %s167, %s168
      %s170 = smul.addr %s169, 4
      %s171 = scalar_lea.vmem %s0, %s170
      %s172 = smul.u32 10, %s18
      %s173 = smul.u32 10, %s18
      %p174 = scmp.lt.s32.totalorder %s17, 1
      %s175 = scalar_select %p174, %s17, 1
      %p176 = scmp.lt.s32.totalorder %s173, 9
      %s177 = scalar_select %p176, %s173, 9
      %s178 = smul.addr %s175, 10
      %s179 = sadd.s32 %s177, %s178
      %s180 = smul.addr %s179, 4
      %s181 = scalar_lea.vmem %s2, %s180
      %s182 = smul.u32 10, %s18
      %v184 = vld [vmem:[%s171] sm:$0xf]
      %v185 = vld [vmem:[%s171 + $0x4] sm:$0xf]
      %v186 = vld [vmem:[%s171 + $0x8] sm:$0xf]
      %v187 = vld [vmem:[%s171 + $0xc] sm:$0xf]
      %v188 = vld [vmem:[%s171 + $0x10] sm:$0xf]
      %v189 = vld [vmem:[%s171 + $0x14] sm:$0xf]
      %v190 = vld [vmem:[%s171 + $0x18] sm:$0xf]
      %v191 = vld [vmem:[%s171 + $0x1c] sm:$0xf]
      %v192 = vld [vmem:[%s171 + $0x20] sm:$0xf]
      %v193 = vld [vmem:[%s171 + $0x24] sm:$0xf]
      %v194 = vld [vmem:[%s1] sm:$0xf]
      %v195 = vld [vmem:[%s1 + $0x4] sm:$0xf]
      %v196 = vld [vmem:[%s1 + $0x8] sm:$0xf]
      %v197 = vld [vmem:[%s1 + $0xc] sm:$0xf]
      %v198 = vld [vmem:[%s1 + $0x10] sm:$0xf]
      %v199 = vld [vmem:[%s1 + $0x14] sm:$0xf]
      %v210 = vunpack.c.l.b16 %v184
      %v211 = vunpack.c.l.b16 %v185
      %v212 = vunpack.c.l.b16 %v186
      %v213 = vunpack.c.l.b16 %v187
      %v214 = vunpack.c.l.b16 %v188
      %v215 = vunpack.c.l.b16 %v189
      %v216 = vunpack.c.l.b16 %v190
      %v217 = vunpack.c.l.b16 %v191
      %v218 = vunpack.c.l.b16 %v192
      %v219 = vunpack.c.l.b16 %v193
      %v220 = vpack.c.b16 %v211, %v210
      %v221 = vpack.c.b16 %v213, %v212
      %v222 = vpack.c.b16 %v215, %v214
      %v223 = vpack.c.b16 %v217, %v216
      %v224 = vpack.c.b16 %v219, %v218
      %v231 = vunpack.c.l.b16 %v194
      %v232 = vunpack.c.l.b16 %v195
      %v233 = vunpack.c.l.b16 %v196
      %v234 = vunpack.c.l.b16 %v197
      %v235 = vunpack.c.l.b16 %v198
      %v236 = vunpack.c.l.b16 %v199
      %v237 = vpack.c.b16 %v232, %v231
      %v238 = vpack.c.b16 %v234, %v233
      %v239 = vpack.c.b16 %v236, %v235
      %vm243 = vcmask 392192
      %v245 = vsel %vm243, %v220, 0
      %v248 = vsel %vm243, %v221, 0
      %v251 = vsel %vm243, %v222, 0
      %v254 = vsel %vm243, %v223, 0
      %v257 = vsel %vm243, %v224, 0
      %259 = vmatprep.subr.bf16.mxu0 0
      %260 = vmatpush1.bf16.msra.mxu0 %v237
      %261 = vmatprep.subr.bf16.mxu0 0
      %262 = vmatpush1.bf16.msra.mxu0 %v238
      %263 = vmatprep.subr.bf16.mxu0 0
      %264 = vmatpush1.bf16.msra.mxu0 %v239
      %265 = vmatprep.subr.bf16.mxu0 0
      %266 = vmatpush1.bf16.msra.mxu0 0
      %267 = vmatprep.subr.bf16.mxu0 0
      %268 = vmatpush1.bf16.msra.mxu0 0
      %269 = vmatprep.subr.bf16.mxu0 0
      %270 = vmatpush1.bf16.msra.mxu0 0
      %271 = vmatprep.subr.bf16.mxu0 0
      %272 = vmatpush1.bf16.msra.mxu0 0
      %273 = vmatprep.subr.bf16.mxu0 0
      %274 = vmatpush1.bf16.msra.mxu0 0
      %275 = vmatprep.subr.bf16.mxu0 0
      %276 = vmatpush1.bf16.msra.mxu0 0
      %277 = vmatprep.subr.bf16.mxu0 0
      %278 = vmatpush1.bf16.msra.mxu0 0
      %279 = vmatprep.subr.bf16.mxu0 0
      %280 = vmatpush1.bf16.msra.mxu0 0
      %281 = vmatprep.subr.bf16.mxu0 0
      %282 = vmatpush1.bf16.msra.mxu0 0
      %283 = vmatprep.subr.bf16.mxu0 0
      %284 = vmatpush1.bf16.msra.mxu0 0
      %285 = vmatprep.subr.bf16.mxu0 0
      %286 = vmatpush1.bf16.msra.mxu0 0
      %287 = vmatprep.subr.bf16.mxu0 0
      %288 = vmatpush1.bf16.msra.mxu0 0
      %289 = vmatprep.subr.bf16.mxu0 0
      %290 = vmatpush1.bf16.msra.mxu0 0
      %291 = vmatprep.mubr.bf16.mxu0 0
      %292 = vmatmul.mubr.bf16.gmra.mrb[0].mxu0 %v245
      %v293 = vpop.f32.mrb[0].mxu0
      %v294 = vadd.f32 0.0, %v293
      %v295 = vpop.f32.mrb[0].mxu0
      %v296 = vpop.f32.mrb[0].mxu0
      %v297 = vadd.f32 0.0, %v296
      %v298 = vpop.f32.mrb[0].mxu0
      %299 = vmatprep.mubr.bf16.mxu0 0
      %300 = vmatmul.mubr.bf16.gmra.mrb[0].mxu0 %v248
      %v301 = vpop.f32.mrb[0].mxu0
      %v302 = vadd.f32 0.0, %v301
      %v303 = vpop.f32.mrb[0].mxu0
      %v304 = vpop.f32.mrb[0].mxu0
      %v305 = vadd.f32 0.0, %v304
      %v306 = vpop.f32.mrb[0].mxu0
      %307 = vmatprep.mubr.bf16.mxu0 0
      %308 = vmatmul.mubr.bf16.gmra.mrb[0].mxu0 %v251
      %v309 = vpop.f32.mrb[0].mxu0
      %v310 = vadd.f32 0.0, %v309
      %v311 = vpop.f32.mrb[0].mxu0
      %v312 = vpop.f32.mrb[0].mxu0
      %v313 = vadd.f32 0.0, %v312
      %v314 = vpop.f32.mrb[0].mxu0
      %315 = vmatprep.mubr.bf16.mxu0 0
      %316 = vmatmul.mubr.bf16.gmra.mrb[0].mxu0 %v254
      %v317 = vpop.f32.mrb[0].mxu0
      %v318 = vadd.f32 0.0, %v317
      %v319 = vpop.f32.mrb[0].mxu0
      %v320 = vpop.f32.mrb[0].mxu0
      %v321 = vadd.f32 0.0, %v320
      %v322 = vpop.f32.mrb[0].mxu0
      %323 = vmatprep.mubr.bf16.mxu0 0
      %324 = vmatmul.mubr.bf16.gmra.mrb[0].mxu0 %v257
      %v325 = vpop.f32.mrb[0].mxu0
      %v326 = vadd.f32 0.0, %v325
      %v327 = vpop.f32.mrb[0].mxu0
      %v328 = vpop.f32.mrb[0].mxu0
      %v329 = vadd.f32 0.0, %v328
      %v330 = vpop.f32.mrb[0].mxu0
      %331 = vdwg.mxu0
      %vm332 = vcmp.gt.f32.partialorder %v294, 0.0
      %vm333 = vcmp.gt.f32.partialorder %v297, 0.0
      %vm334 = vcmp.gt.f32.partialorder %v302, 0.0
      %vm335 = vcmp.gt.f32.partialorder %v305, 0.0
      %vm336 = vcmp.gt.f32.partialorder %v310, 0.0
      %vm337 = vcmp.gt.f32.partialorder %v313, 0.0
      %vm338 = vcmp.gt.f32.partialorder %v318, 0.0
      %vm339 = vcmp.gt.f32.partialorder %v321, 0.0
      %vm340 = vcmp.gt.f32.partialorder %v326, 0.0
      %vm341 = vcmp.gt.f32.partialorder %v329, 0.0
      %v342 = vmul.f32 %v294, 0.2
      %v343 = vmul.f32 %v297, 0.2
      %v344 = vmul.f32 %v302, 0.2
      %v345 = vmul.f32 %v305, 0.2
      %v346 = vmul.f32 %v310, 0.2
      %v347 = vmul.f32 %v313, 0.2
      %v348 = vmul.f32 %v318, 0.2
      %v349 = vmul.f32 %v321, 0.2
      %v350 = vmul.f32 %v326, 0.2
      %v351 = vmul.f32 %v329, 0.2
      %v352 = vsel %vm332, %v294, %v342
      %v353 = vsel %vm333, %v297, %v343
      %v354 = vsel %vm334, %v302, %v344
      %v355 = vsel %vm335, %v305, %v345
      %v356 = vsel %vm336, %v310, %v346
      %v357 = vsel %vm337, %v313, %v347
      %v358 = vsel %vm338, %v318, %v348
      %v359 = vsel %vm339, %v321, %v349
      %v360 = vsel %vm340, %v326, %v350
      %v361 = vsel %vm341, %v329, %v351
      %v362 = vpack.c.bf16 %v353, %v352
      %v363 = vpack.c.bf16 %v355, %v354
      %v364 = vpack.c.bf16 %v357, %v356
      %v365 = vpack.c.bf16 %v359, %v358
      %v366 = vpack.c.bf16 %v361, %v360
      %v372 = vunpack.c.l.b16 %v362
      %v373 = vunpack.c.h.b16 %v362
      %v374 = vunpack.c.l.b16 %v363
      %v375 = vunpack.c.h.b16 %v363
      %v376 = vunpack.c.l.b16 %v364
      %v377 = vunpack.c.h.b16 %v364
      %v378 = vunpack.c.l.b16 %v365
      %v379 = vunpack.c.h.b16 %v365
      %v380 = vunpack.c.l.b16 %v366
      %v381 = vunpack.c.h.b16 %v366
      %v382 = vpack.c.b16 %v372, %v372
      %v383 = vpack.c.b16 %v373, %v373
      %v384 = vpack.c.b16 %v374, %v374
      %v385 = vpack.c.b16 %v375, %v375
      %v386 = vpack.c.b16 %v376, %v376
      %v387 = vpack.c.b16 %v377, %v377
      %v388 = vpack.c.b16 %v378, %v378
      %v389 = vpack.c.b16 %v379, %v379
      %v390 = vpack.c.b16 %v380, %v380
      %v391 = vpack.c.b16 %v381, %v381
      %402 = vst [vmem:[%s181] sm:$0xf] %v382
      %403 = vst [vmem:[%s181 + $0x4] sm:$0xf] %v383
      %404 = vst [vmem:[%s181 + $0x8] sm:$0xf] %v384
      %405 = vst [vmem:[%s181 + $0xc] sm:$0xf] %v385
      %406 = vst [vmem:[%s181 + $0x10] sm:$0xf] %v386
      %407 = vst [vmem:[%s181 + $0x14] sm:$0xf] %v387
      %408 = vst [vmem:[%s181 + $0x18] sm:$0xf] %v388
      %409 = vst [vmem:[%s181 + $0x1c] sm:$0xf] %v389
      %410 = vst [vmem:[%s181 + $0x20] sm:$0xf] %v390
      %411 = vst [vmem:[%s181 + $0x24] sm:$0xf] %v391
      %s412 = smul.u32 10, %s18
      %p413 = scmp.lt.s32.totalorder %s17, 1
      %s414 = scalar_select %p413, %s17, 1
      %p415 = scmp.lt.s32.totalorder %s412, 9
      %s416 = scalar_select %p415, %s412, 9
      %s417 = smul.addr %s414, 10
      %s418 = sadd.s32 %s416, %s417
      %s419 = smul.addr %s418, 4
      %s420 = scalar_lea.vmem %s2, %s419
      // Predicated region
      $region29: #{discriminator_forward.3} parent=27 // pred_check
        %p421 = pneg %p94
      $region30: #{discriminator_forward.3} parent=27 // pred_check_branch
        %423 = sbr.rel (%p421) target = $region32
      $region31: #{discriminator_forward.3} parent=27 // pred_region
        %s424 = smul.u32 10, %s18
      $region32: #{discriminator_forward.3} parent=27 // pred_fallthru
        _
    $region28: #{discriminator_forward.3} parent=5 // pred_fallthru
      _
    %p425 = scmp.le.s32.totalorder 2, %s8
    // Predicated region
    $region33: #{discriminator_forward.3} parent=5 // pred_check
      %p426 = pneg %p425
    $region34: #{discriminator_forward.3} parent=5 // pred_check_branch
      %428 = sbr.rel (%p426) target = $region36
    $region35: #{discriminator_forward.3} parent=5 // pred_region
      %s429 = ssub.s32 %s8, 2
      // Predicated region
      $region37: #{discriminator_forward.3} parent=35 // pred_check
        %p430 = pneg %p100
      $region38: #{discriminator_forward.3} parent=35 // pred_check_branch
        %432 = sbr.rel (%p430) target = $region40
      $region39: #{discriminator_forward.3} parent=35 // pred_region
        %s433 = smul.u32 10, %s20
        %p434 = scmp.lt.s32.totalorder %s19, 1
        %s435 = scalar_select %p434, %s19, 1
        %p436 = scmp.lt.s32.totalorder %s433, 9
        %s437 = scalar_select %p436, %s433, 9
        %s438 = smul.addr %s435, 10
        %s439 = sadd.s32 %s437, %s438
        %s440 = smul.addr %s439, 4
        %s441 = scalar_lea.vmem %s2, %s440
      $region40: #{discriminator_forward.3} parent=35 // pred_fallthru
        _
    $region36: #{discriminator_forward.3} parent=5 // pred_fallthru
      _
  $region6: #{discriminator_forward.3} parent=0 // loop_footer
    %s12 = sadd.s32 1, %s8
  $region7: #{discriminator_forward.3} parent=0 // loop_footer_branch
    %7 = sbr.rel target = $region3
  $region8: #{discriminator_forward.3} parent=0 // loop_exit
    _

// kernel: discriminator_forward.4
$region0: #{discriminator_forward.4}
  #allocation0 [shape = 'u32[]', space=smem, size = 0x4, offset = 0x4, fixed_abs, tag = 'smem constant byte address 0x4 - core index']
  #allocation1 [shape = 'u32[144,128]{1,0:T(1,128)}', space=vmem, size = 0x12000, scoped, tag = 'internal scratch']
  %s0 = inlined_call_operand.vmem [shape: bf16[2,39,128], index: 0, kind: input, shape index: {}]
  %s1 = inlined_call_operand.vmem [shape: bf16[4,128,128], index: 1, kind: input, shape index: {}]
  %s2 = inlined_call_operand.vmem [shape: f32[32,1], index: 2, kind: input, shape index: {}]
  %s3 = inlined_call_operand.vmem [shape: bf16[2,32,128], index: 3, kind: output, shape index: {0}]
  %s4 = inlined_call_operand.vmem [shape: f32[2,1,2,128], index: 4, kind: output, shape index: {1}]
  %5 = xla_tuple %s3, %s4
  %s6 = sld [smem:[#allocation0]]
  $region53: #{discriminator_forward.4} parent=0
    _
  %s8 = ssub.s32 1, %s6
  %s9 = scalar_select 0, %s8, %s6
  loop: start=0, step=1, limit=4
  $region2: #{discriminator_forward.4} parent=0 // loop_pre_header
    _
  $region3: #{discriminator_forward.4} parent=0 // loop_header
    %s11 = sphi 0, %s15
    %p12 = scmp.ge.s32.totalorder %s11, 4
    %s18 = sphi 0, %s30
    %s19 = sphi 0, %s26
    %s20 = sphi 0, %s18
    %s21 = sphi 0, %s19
    %s22 = sphi 0, %s20
    %s23 = sphi 0, %s21
    %s33 = sphi 0, %s35
    %s36 = sphi 0, %s33
    %s37 = sphi 0, %s36
    %s53 = sphi 0, %s37
    %s57 = sphi 0, %s57
    %s59 = sphi 0, %s57
    %s60 = sphi 0, %s59
    %s74 = sphi 0, %s60
    %s80 = sphi 0, %s82
    %s83 = sphi 0, %s80
    %s84 = sphi 0, %s83
    %s100 = sphi 0, %s84
    %s108 = sphi 0, %s110
    %s111 = sphi 0, %s108
    %s112 = sphi 0, %s111
    %s128 = sphi 0, %s112
    %s136 = sphi 0, %s138
    %s139 = sphi 0, %s136
    %s140 = sphi 0, %s139
    %s156 = sphi 0, %s140
  $region4: #{discriminator_forward.4} parent=0 // loop_header_branch
    %14 = sbr.rel (%p12) target = $region8
  $region5: #{discriminator_forward.4} parent=0 // loop_body
    %s16 = ssub.s32 %s11, 1
    %s17 = ssub.s32 %s11, 2
    %s24 = sadd.s32 1, %s19
    %p25 = scmp.ge.s32.totalorder %s24, 1
    %s26 = scalar_select %p25, 0, %s24
    %s27 = sadd.s32 1, %s18
    %s28 = scalar_select %p25, %s27, %s18
    %p29 = scmp.ge.s32.totalorder %s28, 2
    %s30 = scalar_select %p29, 0, %s28
    %s31 = ssub.s32 %s18, %s30
    %p32 = scmp.eq.s32.totalorder %s31, 0
    %s34 = sadd.s32 %s33, 1
    %s35 = scalar_select %p32, %s33, %s34
    %p38 = pneg %p32
    %p39 = scmp.eq.s32.totalorder %s11, 1
    %p40 = por %p38, %p39
    %p41 = scmp.ne.s32.totalorder %s33, %s36
    %p42 = scmp.eq.s32.totalorder %s11, 0
    %p43 = por %p41, %p42
    %p44 = scmp.ne.s32.totalorder %s33, %s36
    %p45 = scmp.eq.s32.totalorder %s16, 1
    %p46 = por %p44, %p45
    %p47 = scmp.ne.s32.totalorder %s36, %s37
    %p48 = scmp.eq.s32.totalorder %s16, 0
    %p49 = por %p47, %p48
    %p50 = scmp.ne.s32.totalorder %s36, %s37
    %p51 = scmp.eq.s32.totalorder %s17, 1
    %p52 = por %p50, %p51
    %p54 = scmp.ne.s32.totalorder %s37, %s53
    %p55 = scmp.eq.s32.totalorder %s17, 0
    %p56 = por %p54, %p55
    %s58 = sadd.s32 %s57, 1
    %p61 = scmp.eq.s32.totalorder %s11, 1
    %p62 = scmp.ne.s32.totalorder %s57, %s59
    %p63 = scmp.eq.s32.totalorder %s11, 0
    %p64 = por %p62, %p63
    %p65 = scmp.ne.s32.totalorder %s57, %s59
    %p66 = scmp.eq.s32.totalorder %s16, 1
    %p67 = por %p65, %p66
    %p68 = scmp.ne.s32.totalorder %s59, %s60
    %p69 = scmp.eq.s32.totalorder %s16, 0
    %p70 = por %p68, %p69
    %p71 = scmp.ne.s32.totalorder %s59, %s60
    %p72 = scmp.eq.s32.totalorder %s17, 1
    %p73 = por %p71, %p72
    %p75 = scmp.ne.s32.totalorder %s60, %s74
    %p76 = scmp.eq.s32.totalorder %s17, 0
    %p77 = por %p75, %p76
    %s78 = ssub.s32 %s19, %s26
    %p79 = scmp.eq.s32.totalorder %s78, 0
    %s81 = sadd.s32 %s80, 1
    %s82 = scalar_select %p79, %s80, %s81
    %p85 = pneg %p79
    %p86 = scmp.eq.s32.totalorder %s11, 1
    %p87 = por %p85, %p86
    %p88 = scmp.ne.s32.totalorder %s80, %s83
    %p89 = scmp.eq.s32.totalorder %s11, 0
    %p90 = por %p88, %p89
    %p91 = scmp.ne.s32.totalorder %s80, %s83
    %p92 = scmp.eq.s32.totalorder %s16, 1
    %p93 = por %p91, %p92
    %p94 = scmp.ne.s32.totalorder %s83, %s84
    %p95 = scmp.eq.s32.totalorder %s16, 0
    %p96 = por %p94, %p95
    %p97 = scmp.ne.s32.totalorder %s83, %s84
    %p98 = scmp.eq.s32.totalorder %s17, 1
    %p99 = por %p97, %p98
    %p101 = scmp.ne.s32.totalorder %s84, %s100
    %p102 = scmp.eq.s32.totalorder %s17, 0
    %p103 = por %p101, %p102
    %s104 = ssub.s32 %s18, %s30
    %s105 = ssub.s32 %s19, %s26
    %s106 = sor.u32 %s104, %s105
    %p107 = scmp.eq.s32.totalorder %s106, 0
    %s109 = sadd.s32 %s108, 1
    %s110 = scalar_select %p107, %s108, %s109
    %p113 = pneg %p107
    %p114 = scmp.eq.s32.totalorder %s11, 1
    %p115 = por %p113, %p114
    %p116 = scmp.ne.s32.totalorder %s108, %s111
    %p117 = scmp.eq.s32.totalorder %s11, 0
    %p118 = por %p116, %p117
    %p119 = scmp.ne.s32.totalorder %s108, %s111
    %p120 = scmp.eq.s32.totalorder %s16, 1
    %p121 = por %p119, %p120
    %p122 = scmp.ne.s32.totalorder %s111, %s112
    %p123 = scmp.eq.s32.totalorder %s16, 0
    %p124 = por %p122, %p123
    %p125 = scmp.ne.s32.totalorder %s111, %s112
    %p126 = scmp.eq.s32.totalorder %s17, 1
    %p127 = por %p125, %p126
    %p129 = scmp.ne.s32.totalorder %s112, %s128
    %p130 = scmp.eq.s32.totalorder %s17, 0
    %p131 = por %p129, %p130
    %s132 = ssub.s32 %s18, %s30
    %s133 = ssub.s32 %s19, %s26
    %s134 = sor.u32 %s132, %s133
    %p135 = scmp.eq.s32.totalorder %s134, 0
    %s137 = sadd.s32 %s136, 1
    %s138 = scalar_select %p135, %s136, %s137
    %p141 = pneg %p135
    %p142 = scmp.eq.s32.totalorder %s11, 1
    %p143 = por %p141, %p142
    %p144 = scmp.ne.s32.totalorder %s136, %s139
    %p145 = scmp.eq.s32.totalorder %s11, 0
    %p146 = por %p144, %p145
    %p147 = scmp.ne.s32.totalorder %s136, %s139
    %p148 = scmp.eq.s32.totalorder %s16, 1
    %p149 = por %p147, %p148
    %p150 = scmp.ne.s32.totalorder %s139, %s140
    %p151 = scmp.eq.s32.totalorder %s16, 0
    %p152 = por %p150, %p151
    %p153 = scmp.ne.s32.totalorder %s139, %s140
    %p154 = scmp.eq.s32.totalorder %s17, 1
    %p155 = por %p153, %p154
    %p157 = scmp.ne.s32.totalorder %s140, %s156
    %p158 = scmp.eq.s32.totalorder %s17, 0
    %p159 = por %p157, %p158
    %p160 = scmp.le.s32.totalorder 1, %s11
    %p161 = scmp.lt.s32.totalorder %s11, 3
    %p162 = pnand %p160, %p161
    %p163 = pneg %p162
    // Predicated region
    $region9: #{discriminator_forward.4} parent=5 // pred_check
      _
    $region10: #{discriminator_forward.4} parent=5 // pred_check_branch
      %165 = sbr.rel (%p162) target = $region12
    $region11: #{discriminator_forward.4} parent=5 // pred_region
      %s166 = ssub.s32 %s11, 1
      // Predicated region
      $region13: #{discriminator_forward.4} parent=11 // pred_check
        %p167 = pneg %p70
      $region14: #{discriminator_forward.4} parent=11 // pred_check_branch
        %169 = sbr.rel (%p167) target = $region16
      $region15: #{discriminator_forward.4} parent=11 // pred_region
        _
      $region16: #{discriminator_forward.4} parent=11 // pred_fallthru
        _
      // Predicated region
      $region17: #{discriminator_forward.4} parent=11 // pred_check
        %p170 = pneg %p96
      $region18: #{discriminator_forward.4} parent=11 // pred_check_branch
        %172 = sbr.rel (%p170) target = $region20
      $region19: #{discriminator_forward.4} parent=11 // pred_region
        %s173 = smul.u32 4, %s21
        %p174 = scmp.lt.s32.totalorder %s173, 3
        %s175 = scalar_select %p174, %s173, 3
        %s176 = smul.addr %s175, 8
        %s177 = scalar_lea.vmem %s2, %s176
        %s178 = smul.u32 4, %s21
      $region20: #{discriminator_forward.4} parent=11 // pred_fallthru
        _
    $region12: #{discriminator_forward.4} parent=5 // pred_fallthru
      _
    %p179 = scmp.lt.s32.totalorder %s11, 2
    // Predicated region
    $region21: #{discriminator_forward.4} parent=5 // pred_check
      %p180 = pneg %p179
    $region22: #{discriminator_forward.4} parent=5 // pred_check_branch
      %182 = sbr.rel (%p180) target = $region24
    $region23: #{discriminator_forward.4} parent=5 // pred_region
      // Predicated region
      $region25: #{discriminator_forward.4} parent=23 // pred_check
        %p183 = pneg %p43
      $region26: #{discriminator_forward.4} parent=23 // pred_check_branch
        %185 = sbr.rel (%p183) target = $region28
      $region27: #{discriminator_forward.4} parent=23 // pred_region
        %p186 = scmp.lt.s32.totalorder %s18, 1
        %s187 = scalar_select %p186, %s18, 1
        %s188 = smul.addr %s187, 5
        %s189 = smul.addr %s188, 4
        %s190 = scalar_lea.vmem %s0, %s189
      $region28: #{discriminator_forward.4} parent=23 // pred_fallthru
        _
    $region24: #{discriminator_forward.4} parent=5 // pred_fallthru
      _
    %p191 = scmp.le.s32.totalorder 1, %s11
    %p192 = scmp.lt.s32.totalorder %s11, 3
    %p193 = pnand %p191, %p192
    %p194 = pneg %p193
    // Predicated region
    $region29: #{discriminator_forward.4} parent=5 // pred_check
      _
    $region30: #{discriminator_forward.4} parent=5 // pred_check_branch
      %196 = sbr.rel (%p193) target = $region32
    $region31: #{discriminator_forward.4} parent=5 // pred_region
      %s197 = ssub.s32 %s11, 1
      %p198 = scmp.lt.s32.totalorder %s20, 1
      %s199 = scalar_select %p198, %s20, 1
      %s200 = smul.addr %s199, 5
      %s201 = smul.addr %s200, 4
      %s202 = scalar_lea.vmem %s0, %s201
      %p203 = pneg %p49
      %p204 = pneg %p46
      %p205 = pneg %p70
      %p206 = pneg %p67
      %s207 = smul.u32 4, %s21
      %p208 = scmp.lt.s32.totalorder %s207, 3
      %s209 = scalar_select %p208, %s207, 3
      %s210 = smul.addr %s209, 8
      %s211 = scalar_lea.vmem %s2, %s210
      %p212 = pneg %p96
      %p213 = pneg %p93
      %p214 = pneg %p124
      %p215 = pneg %p121
      %s216 = smul.u32 4, %s21
      %p217 = scmp.lt.s32.totalorder %s20, 1
      %s218 = scalar_select %p217, %s20, 1
      %p219 = scmp.lt.s32.totalorder %s216, 3
      %s220 = scalar_select %p219, %s216, 3
      %s221 = smul.addr %s218, 4
      %s222 = sadd.s32 %s220, %s221
      %s223 = smul.addr %s222, 4
      %s224 = scalar_lea.vmem %s3, %s223
      %p225 = pneg %p152
      %p226 = pneg %p149
      %p227 = scmp.lt.s32.totalorder %s20, 1
      %s228 = scalar_select %p227, %s20, 1
      %p229 = scmp.lt.s32.totalorder %s21, 0
      %s230 = scalar_select %p229, %s21, 0
      %s231 = sadd.s32 %s230, %s228
      %s232 = smul.addr %s231, 2
      %s233 = scalar_lea.vmem %s4, %s232
      %p234 = scmp.lt.s32.totalorder %s20, 1
      %s235 = scalar_select %p234, %s20, 1
      %s236 = smul.addr %s235, 5
      %s237 = smul.addr %s236, 4
      %s238 = scalar_lea.vmem %s0, %s237
      %s239 = smul.u32 4, %s21
      %p240 = scmp.lt.s32.totalorder %s239, 3
      %s241 = scalar_select %p240, %s239, 3
      %s242 = smul.addr %s241, 8
      %s243 = scalar_lea.vmem %s2, %s242
      %s244 = smul.u32 4, %s21
      %s245 = smul.u32 4, %s21
      %p246 = scmp.lt.s32.totalorder %s20, 1
      %s247 = scalar_select %p246, %s20, 1
      %p248 = scmp.lt.s32.totalorder %s245, 3
      %s249 = scalar_select %p248, %s245, 3
      %s250 = smul.addr %s247, 4
      %s251 = sadd.s32 %s249, %s250
      %s252 = smul.addr %s251, 4
      %s253 = scalar_lea.vmem %s3, %s252
      %s254 = smul.u32 4, %s21
      %p255 = scmp.lt.s32.totalorder %s20, 1
      %s256 = scalar_select %p255, %s20, 1
      %p257 = scmp.lt.s32.totalorder %s21, 0
      %s258 = scalar_select %p257, %s21, 0
      %s259 = sadd.s32 %s258, %s256
      %s260 = smul.addr %s259, 2
      %s261 = scalar_lea.vmem %s4, %s260
      %v263 = vld [vmem:[%s238] sm:$0xf]
      %v264 = vld [vmem:[%s238 + $0x4] sm:$0xf]
      %v265 = vld [vmem:[%s238 + $0x8] sm:$0xf]
      %v266 = vld [vmem:[%s238 + $0xc] sm:$0xf]
      %v267 = vld [vmem:[%s1] sm:$0xf]
      %v268 = vld [vmem:[%s1 + $0x4] sm:$0xf]
      %v269 = vld [vmem:[%s1 + $0x8] sm:$0xf]
      %v270 = vld [vmem:[%s1 + $0xc] sm:$0xf]
      %v271 = vld [vmem:[%s1 + $0x10] sm:$0xf]
      %v272 = vld [vmem:[%s1 + $0x14] sm:$0xf]
      %v273 = vld [vmem:[%s1 + $0x18] sm:$0xf]
      %v274 = vld [vmem:[%s1 + $0x1c] sm:$0xf]
      %v275 = vld [vmem:[%s1 + $0x20] sm:$0xf]
      %v276 = vld [vmem:[%s1 + $0x24] sm:$0xf]
      %v277 = vld [vmem:[%s1 + $0x28] sm:$0xf]
      %v278 = vld [vmem:[%s1 + $0x2c] sm:$0xf]
      %v279 = vld [vmem:[%s1 + $0x30] sm:$0xf]
      %v280 = vld [vmem:[%s1 + $0x34] sm:$0xf]
      %v281 = vld [vmem:[%s1 + $0x38] sm:$0xf]
      %v282 = vld [vmem:[%s1 + $0x3c] sm:$0xf]
      %v283 = vld [vmem:[%s238 + $0x10] sm:$0x1]
      %s284 = scalar_lea.vmem %s1, 64
      %v285 = vld [vmem:[%s284] sm:$0xf]
      %v286 = vld [vmem:[%s284 + $0x4] sm:$0xf]
      %v287 = vld [vmem:[%s284 + $0x8] sm:$0xf]
      %v288 = vld [vmem:[%s284 + $0xc] sm:$0xf]
      %v289 = vld [vmem:[%s284 + $0x10] sm:$0xf]
      %v290 = vld [vmem:[%s284 + $0x14] sm:$0xf]
      %v291 = vld [vmem:[%s284 + $0x18] sm:$0xf]
      %v292 = vld [vmem:[%s284 + $0x1c] sm:$0xf]
      %v293 = vld [vmem:[%s284 + $0x20] sm:$0xf]
      %v294 = vld [vmem:[%s284 + $0x24] sm:$0xf]
      %v295 = vld [vmem:[%s284 + $0x28] sm:$0xf]
      %v296 = vld [vmem:[%s284 + $0x2c] sm:$0xf]
      %v297 = vld [vmem:[%s284 + $0x30] sm:$0xf]
      %v298 = vld [vmem:[%s284 + $0x34] sm:$0xf]
      %v299 = vld [vmem:[%s284 + $0x38] sm:$0xf]
      %v300 = vld [vmem:[%s284 + $0x3c] sm:$0xf]
      %v306 = vunpack.c.l.b16 %v263
      %v307 = vunpack.c.l.b16 %v264
      %v308 = vunpack.c.l.b16 %v265
      %v309 = vunpack.c.l.b16 %v266
      %v310 = vunpack.c.l.b16 %v283
      %v311 = vpack.c.b16 %v307, %v306
      %v312 = vpack.c.b16 %v309, %v308
      %v313 = vpack.c.b16 %v310, %v310
      %vm314 = vsmask.f32 7424
      %v316 = vshrl.u32 %v311, 16
      %v318 = vshll.u32 %v311, 16
      %v320 = vrot.slane %v318, 1
      %v321 = vor.u32 %v316, %v320
      %v323 = vshll.u32 %v312, 16
      %v325 = vrot.slane %v323, 1
      %v326 = vsel %vm314, %v321, %v325
      %v327 = vshrl.u32 %v312, 16
      %v329 = vor.u32 %v327, %v325
      %v331 = vshll.u32 %v313, 16
      %v333 = vrot.slane %v331, 1
      %v334 = vsel %vm314, %v329, %v333
      %v353 = vunpack.c.l.b16 %v285
      %v354 = vunpack.c.l.b16 %v286
      %v355 = vunpack.c.l.b16 %v287
      %v356 = vunpack.c.l.b16 %v288
      %v357 = vunpack.c.l.b16 %v289
      %v358 = vunpack.c.l.b16 %v290
      %v359 = vunpack.c.l.b16 %v291
      %v360 = vunpack.c.l.b16 %v292
      %v361 = vunpack.c.l.b16 %v293
      %v362 = vunpack.c.l.b16 %v294
      %v363 = vunpack.c.l.b16 %v295
      %v364 = vunpack.c.l.b16 %v296
      %v365 = vunpack.c.l.b16 %v297
      %v366 = vunpack.c.l.b16 %v298
      %v367 = vunpack.c.l.b16 %v299
      %v368 = vunpack.c.l.b16 %v300
      %v369 = vpack.c.b16 %v354, %v353
      %v370 = vpack.c.b16 %v356, %v355
      %v371 = vpack.c.b16 %v358, %v357
      %v372 = vpack.c.b16 %v360, %v359
      %v373 = vpack.c.b16 %v362, %v361
      %v374 = vpack.c.b16 %v364, %v363
      %v375 = vpack.c.b16 %v366, %v365
      %v376 = vpack.c.b16 %v368, %v367
      %385 = vmatprep.subr.bf16.mxu0 0
      %386 = vmatpush1.bf16.msra.mxu0 %v369
      %387 = vmatprep.subr.bf16.mxu0 0
      %388 = vmatpush1.bf16.msra.mxu0 %v370
      %389 = vmatprep.subr.bf16.mxu0 0
      %390 = vmatpush1.bf16.msra.mxu0 %v371
      %391 = vmatprep.subr.bf16.mxu0 0
      %392 = vmatpush1.bf16.msra.mxu0 %v372
      %393 = vmatprep.subr.bf16.mxu0 0
      %394 = vmatpush1.bf16.msra.mxu0 %v373
      %395 = vmatprep.subr.bf16.mxu0 0
      %396 = vmatpush1.bf16.msra.mxu0 %v374
      %397 = vmatprep.subr.bf16.mxu0 0
      %398 = vmatpush1.bf16.msra.mxu0 %v375
      %399 = vmatprep.subr.bf16.mxu0 0
      %400 = vmatpush1.bf16.msra.mxu0 %v376
      %401 = vmatprep.subr.bf16.mxu0 0
      %402 = vmatpush1.bf16.msra.mxu0 0
      %403 = vmatprep.subr.bf16.mxu0 0
      %404 = vmatpush1.bf16.msra.mxu0 0
      %405 = vmatprep.subr.bf16.mxu0 0
      %406 = vmatpush1.bf16.msra.mxu0 0
      %407 = vmatprep.subr.bf16.mxu0 0
      %408 = vmatpush1.bf16.msra.mxu0 0
      %409 = vmatprep.subr.bf16.mxu0 0
      %410 = vmatpush1.bf16.msra.mxu0 0
      %411 = vmatprep.subr.bf16.mxu0 0
      %412 = vmatpush1.bf16.msra.mxu0 0
      %413 = vmatprep.subr.bf16.mxu0 0
      %414 = vmatpush1.bf16.msra.mxu0 0
      %415 = vmatprep.subr.bf16.mxu0 0
      %416 = vmatpush1.bf16.msra.mxu0 0
      %417 = vmatprep.mubr.bf16.mxu0 0
      %418 = vmatmul.mubr.bf16.gmra.mrb[0].mxu0 %v326
      %v419 = vpop.f32.mrb[0].mxu0
      %v420 = vadd.f32 0.0, %v419
      %v421 = vpop.f32.mrb[0].mxu0
      %v422 = vpop.f32.mrb[0].mxu0
      %v423 = vadd.f32 0.0, %v422
      %v424 = vpop.f32.mrb[0].mxu0
      %425 = vmatprep.mubr.bf16.mxu0 0
      %426 = vmatmul.mubr.bf16.gmra.mrb[0].mxu0 %v334
      %v427 = vpop.f32.mrb[0].mxu0
      %v428 = vadd.f32 0.0, %v427
      %v429 = vpop.f32.mrb[0].mxu0
      %v430 = vpop.f32.mrb[0].mxu0
      %v431 = vadd.f32 0.0, %v430
      %v432 = vpop.f32.mrb[0].mxu0
      %433 = vdwg.mxu0
      %v452 = vunpack.c.l.b16 %v267
      %v453 = vunpack.c.l.b16 %v268
      %v454 = vunpack.c.l.b16 %v269
      %v455 = vunpack.c.l.b16 %v270
      %v456 = vunpack.c.l.b16 %v271
      %v457 = vunpack.c.l.b16 %v272
      %v458 = vunpack.c.l.b16 %v273
      %v459 = vunpack.c.l.b16 %v274
      %v460 = vunpack.c.l.b16 %v275
      %v461 = vunpack.c.l.b16 %v276
      %v462 = vunpack.c.l.b16 %v277
      %v463 = vunpack.c.l.b16 %v278
      %v464 = vunpack.c.l.b16 %v279
      %v465 = vunpack.c.l.b16 %v280
      %v466 = vunpack.c.l.b16 %v281
      %v467 = vunpack.c.l.b16 %v282
      %v468 = vpack.c.b16 %v453, %v452
      %v469 = vpack.c.b16 %v455, %v454
      %v470 = vpack.c.b16 %v457, %v456
      %v471 = vpack.c.b16 %v459, %v458
      %v472 = vpack.c.b16 %v461, %v460
      %v473 = vpack.c.b16 %v463, %v462
      %v474 = vpack.c.b16 %v465, %v464
      %v475 = vpack.c.b16 %v467, %v466
      %484 = vmatprep.subr.bf16.mxu0 0
      %485 = vmatpush1.bf16.msra.mxu0 %v468
      %486 = vmatprep.subr.bf16.mxu0 0
      %487 = vmatpush1.bf16.msra.mxu0 %v469
      %488 = vmatprep.subr.bf16.mxu0 0
      %489 = vmatpush1.bf16.msra.mxu0 %v470
      %490 = vmatprep.subr.bf16.mxu0 0
      %491 = vmatpush1.bf16.msra.mxu0 %v471
      %492 = vmatprep.subr.bf16.mxu0 0
      %493 = vmatpush1.bf16.msra.mxu0 %v472
      %494 = vmatprep.subr.bf16.mxu0 0
      %495 = vmatpush1.bf16.msra.mxu0 %v473
      %496 = vmatprep.subr.bf16.mxu0 0
      %497 = vmatpush1.bf16.msra.mxu0 %v474
      %498 = vmatprep.subr.bf16.mxu0 0
      %499 = vmatpush1.bf16.msra.mxu0 %v475
      %500 = vmatprep.subr.bf16.mxu0 0
      %501 = vmatpush1.bf16.msra.mxu0 0
      %502 = vmatprep.subr.bf16.mxu0 0
      %503 = vmatpush1.bf16.msra.mxu0 0
      %504 = vmatprep.subr.bf16.mxu0 0
      %505 = vmatpush1.bf16.msra.mxu0 0
      %506 = vmatprep.subr.bf16.mxu0 0
      %507 = vmatpush1.bf16.msra.mxu0 0
      %508 = vmatprep.subr.bf16.mxu0 0
      %509 = vmatpush1.bf16.msra.mxu0 0
      %510 = vmatprep.subr.bf16.mxu0 0
      %511 = vmatpush1.bf16.msra.mxu0 0
      %512 = vmatprep.subr.bf16.mxu0 0
      %513 = vmatpush1.bf16.msra.mxu0 0
      %514 = vmatprep.subr.bf16.mxu0 0
      %515 = vmatpush1.bf16.msra.mxu0 0
      %516 = vmatprep.mubr.bf16.mxu0 0
      %517 = vmatmul.mubr.bf16.gmra.mrb[0].mxu0 %v311
      %v518 = vpop.f32.mrb[0].mxu0
      %v519 = vadd.f32 %v420, %v518
      %v520 = vpop.f32.mrb[0].mxu0
      %v521 = vpop.f32.mrb[0].mxu0
      %v522 = vadd.f32 %v423, %v521
      %v523 = vpop.f32.mrb[0].mxu0
      %524 = vmatprep.mubr.bf16.mxu0 0
      %525 = vmatmul.mubr.bf16.gmra.mrb[0].mxu0 %v312
      %v526 = vpop.f32.mrb[0].mxu0
      %v527 = vadd.f32 %v428, %v526
      %v528 = vpop.f32.mrb[0].mxu0
      %v529 = vpop.f32.mrb[0].mxu0
      %v530 = vadd.f32 %v431, %v529
      %v531 = vpop.f32.mrb[0].mxu0
      %532 = vdwg.mxu0
      %v533 = vld [vmem:[%s238] sm:$0xc]
      %v534 = vld [vmem:[%s238 + $0x10] sm:$0x7]
      %s535 = scalar_lea.vmem %s1, 128
      %v536 = vld [vmem:[%s535] sm:$0xf]
      %v537 = vld [vmem:[%s535 + $0x4] sm:$0xf]
      %v538 = vld [vmem:[%s535 + $0x8] sm:$0xf]
      %v539 = vld [vmem:[%s535 + $0xc] sm:$0xf]
      %v540 = vld [vmem:[%s535 + $0x10] sm:$0xf]
      %v541 = vld [vmem:[%s535 + $0x14] sm:$0xf]
      %v542 = vld [vmem:[%s535 + $0x18] sm:$0xf]
      %v543 = vld [vmem:[%s535 + $0x1c] sm:$0xf]
      %v544 = vld [vmem:[%s535 + $0x20] sm:$0xf]
      %v545 = vld [vmem:[%s535 + $0x24] sm:$0xf]
      %v546 = vld [vmem:[%s535 + $0x28] sm:$0xf]
      %v547 = vld [vmem:[%s535 + $0x2c] sm:$0xf]
      %v548 = vld [vmem:[%s535 + $0x30] sm:$0xf]
      %v549 = vld [vmem:[%s535 + $0x34] sm:$0xf]
      %v550 = vld [vmem:[%s535 + $0x38] sm:$0xf]
      %v551 = vld [vmem:[%s535 + $0x3c] sm:$0xf]
      %v554 = vunpack.c.l.b16 %v533
      %v555 = vunpack.c.l.b16 %v534
      %v556 = vpack.c.b16 %v307, %v554
      %v557 = vpack.c.b16 %v555, %v555
      %vm558 = vsmask.f32 5376
      %v560 = vshrl.u32 %v556, 16
      %v562 = vrot.slane %v560, 2
      %v563 = vshll.u32 %v556, 16
      %v565 = vrot.slane %v563, 3
      %v566 = vor.u32 %v562, %v565
      %v567 = vrot.slane %v327, 2
      %v568 = vrot.slane %v323, 3
      %v569 = vor.u32 %v567, %v568
      %v570 = vsel %vm558, %v566, %v569
      %v572 = vshrl.u32 %v557, 16
      %v574 = vrot.slane %v572, 2
      %v575 = vshll.u32 %v557, 16
      %v577 = vrot.slane %v575, 3
      %v578 = vor.u32 %v574, %v577
      %v579 = vsel %vm558, %v569, %v578
      %v598 = vunpack.c.l.b16 %v536
      %v599 = vunpack.c.l.b16 %v537
      %v600 = vunpack.c.l.b16 %v538
      %v601 = vunpack.c.l.b16 %v539
      %v602 = vunpack.c.l.b16 %v540
      %v603 = vunpack.c.l.b16 %v541
      %v604 = vunpack.c.l.b16 %v542
      %v605 = vunpack.c.l.b16 %v543
      %v606 = vunpack.c.l.b16 %v544
      %v607 = vunpack.c.l.b16 %v545
      %v608 = vunpack.c.l.b16 %v546
      %v609 = vunpack.c.l.b16 %v547
      %v610 = vunpack.c.l.b16 %v548
      %v611 = vunpack.c.l.b16 %v549
      %v612 = vunpack.c.l.b16 %v550
      %v613 = vunpack.c.l.b16 %v551
      %v614 = vpack.c.b16 %v599, %v598
      %v615 = vpack.c.b16 %v601, %v600
      %v616 = vpack.c.b16 %v603, %v602
      %v617 = vpack.c.b16 %v605, %v604
      %v618 = vpack.c.b16 %v607, %v606
      %v619 = vpack.c.b16 %v609, %v608
      %v620 = vpack.c.b16 %v611, %v610
      %v621 = vpack.c.b16 %v613, %v612
      %630 = vmatprep.subr.bf16.mxu0 0
      %631 = vmatpush1.bf16.msra.mxu0 %v614
      %632 = vmatprep.subr.bf16.mxu0 0
      %633 = vmatpush1.bf16.msra.mxu0 %v615
      %634 = vmatprep.subr.bf16.mxu0 0
      %635 = vmatpush1.bf16.msra.mxu0 %v616
      %636 = vmatprep.subr.bf16.mxu0 0
      %637 = vmatpush1.bf16.msra.mxu0 %v617
      %638 = vmatprep.subr.bf16.mxu0 0
      %639 = vmatpush1.bf16.msra.mxu0 %v618
      %640 = vmatprep.subr.bf16.mxu0 0
      %641 = vmatpush1.bf16.msra.mxu0 %v619
      %642 = vmatprep.subr.bf16.mxu0 0
      %643 = vmatpush1.bf16.msra.mxu0 %v620
      %644 = vmatprep.subr.bf16.mxu0 0
      %645 = vmatpush1.bf16.msra.mxu0 %v621
      %646 = vmatprep.subr.bf16.mxu0 0
      %647 = vmatpush1.bf16.msra.mxu0 0
      %648 = vmatprep.subr.bf16.mxu0 0
      %649 = vmatpush1.bf16.msra.mxu0 0
      %650 = vmatprep.subr.bf16.mxu0 0
      %651 = vmatpush1.bf16.msra.mxu0 0
      %652 = vmatprep.subr.bf16.mxu0 0
      %653 = vmatpush1.bf16.msra.mxu0 0
      %654 = vmatprep.subr.bf16.mxu0 0
      %655 = vmatpush1.bf16.msra.mxu0 0
      %656 = vmatprep.subr.bf16.mxu0 0
      %657 = vmatpush1.bf16.msra.mxu0 0
      %658 = vmatprep.subr.bf16.mxu0 0
      %659 = vmatpush1.bf16.msra.mxu0 0
      %660 = vmatprep.subr.bf16.mxu0 0
      %661 = vmatpush1.bf16.msra.mxu0 0
      %662 = vmatprep.mubr.bf16.mxu0 0
      %663 = vmatmul.mubr.bf16.gmra.mrb[0].mxu0 %v570
      %v664 = vpop.f32.mrb[0].mxu0
      %v665 = vadd.f32 0.0, %v664
      %v666 = vpop.f32.mrb[0].mxu0
      %v667 = vpop.f32.mrb[0].mxu0
      %v668 = vadd.f32 0.0, %v667
      %v669 = vpop.f32.mrb[0].mxu0
      %670 = vmatprep.mubr.bf16.mxu0 0
      %671 = vmatmul.mubr.bf16.gmra.mrb[0].mxu0 %v579
      %v672 = vpop.f32.mrb[0].mxu0
      %v673 = vadd.f32 0.0, %v672
      %v674 = vpop.f32.mrb[0].mxu0
      %v675 = vpop.f32.mrb[0].mxu0
      %v676 = vadd.f32 0.0, %v675
      %v677 = vpop.f32.mrb[0].mxu0
      %678 = vdwg.mxu0
      %v679 = vadd.f32 %v519, %v665
      %v680 = vadd.f32 %v522, %v668
      %v681 = vadd.f32 %v527, %v673
      %v682 = vadd.f32 %v530, %v676
      %v683 = vld [vmem:[%s238] sm:$0x8]
      %s684 = scalar_lea.vmem %s1, 192
      %v685 = vld [vmem:[%s684] sm:$0xf]
      %v686 = vld [vmem:[%s684 + $0x4] sm:$0xf]
      %v687 = vld [vmem:[%s684 + $0x8] sm:$0xf]
      %v688 = vld [vmem:[%s684 + $0xc] sm:$0xf]
      %v689 = vld [vmem:[%s684 + $0x10] sm:$0xf]
      %v690 = vld [vmem:[%s684 + $0x14] sm:$0xf]
      %v691 = vld [vmem:[%s684 + $0x18] sm:$0xf]
      %v692 = vld [vmem:[%s684 + $0x1c] sm:$0xf]
      %v693 = vld [vmem:[%s684 + $0x20] sm:$0xf]
      %v694 = vld [vmem:[%s684 + $0x24] sm:$0xf]
      %v695 = vld [vmem:[%s684 + $0x28] sm:$0xf]
      %v696 = vld [vmem:[%s684 + $0x2c] sm:$0xf]
      %v697 = vld [vmem:[%s684 + $0x30] sm:$0xf]
      %v698 = vld [vmem:[%s684 + $0x34] sm:$0xf]
      %v699 = vld [vmem:[%s684 + $0x38] sm:$0xf]
      %v700 = vld [vmem:[%s684 + $0x3c] sm:$0xf]
      %v702 = vunpack.c.l.b16 %v683
      %v703 = vpack.c.b16 %v307, %v702
      %vm704 = vcmask 1044480
      %v705 = vrot.slane %v703, 3
      %v706 = vrot.slane %v312, 3
      %v707 = vsel %vm704, %v705, %v706
      %v708 = vrot.slane %v557, 3
      %v709 = vsel %vm704, %v706, %v708
      %v728 = vunpack.c.l.b16 %v685
      %v729 = vunpack.c.l.b16 %v686
      %v730 = vunpack.c.l.b16 %v687
      %v731 = vunpack.c.l.b16 %v688
      %v732 = vunpack.c.l.b16 %v689
      %v733 = vunpack.c.l.b16 %v690
      %v734 = vunpack.c.l.b16 %v691
      %v735 = vunpack.c.l.b16 %v692
      %v736 = vunpack.c.l.b16 %v693
      %v737 = vunpack.c.l.b16 %v694
      %v738 = vunpack.c.l.b16 %v695
      %v739 = vunpack.c.l.b16 %v696
      %v740 = vunpack.c.l.b16 %v697
      %v741 = vunpack.c.l.b16 %v698
      %v742 = vunpack.c.l.b16 %v699
      %v743 = vunpack.c.l.b16 %v700
      %v744 = vpack.c.b16 %v729, %v728
      %v745 = vpack.c.b16 %v731, %v730
      %v746 = vpack.c.b16 %v733, %v732
      %v747 = vpack.c.b16 %v735, %v734
      %v748 = vpack.c.b16 %v737, %v736
      %v749 = vpack.c.b16 %v739, %v738
      %v750 = vpack.c.b16 %v741, %v740
      %v751 = vpack.c.b16 %v743, %v742
      %760 = vmatprep.subr.bf16.mxu0 0
      %761 = vmatpush1.bf16.msra.mxu0 %v744
      %762 = vmatprep.subr.bf16.mxu0 0
      %763 = vmatpush1.bf16.msra.mxu0 %v745
      %764 = vmatprep.subr.bf16.mxu0 0
      %765 = vmatpush1.bf16.msra.mxu0 %v746
      %766 = vmatprep.subr.bf16.mxu0 0
      %767 = vmatpush1.bf16.msra.mxu0 %v747
      %768 = vmatprep.subr.bf16.mxu0 0
      %769 = vmatpush1.bf16.msra.mxu0 %v748
      %770 = vmatprep.subr.bf16.mxu0 0
      %771 = vmatpush1.bf16.msra.mxu0 %v749
      %772 = vmatprep.subr.bf16.mxu0 0
      %773 = vmatpush1.bf16.msra.mxu0 %v750
      %774 = vmatprep.subr.bf16.mxu0 0
      %775 = vmatpush1.bf16.msra.mxu0 %v751
      %776 = vmatprep.subr.bf16.mxu0 0
      %777 = vmatpush1.bf16.msra.mxu0 0
      %778 = vmatprep.subr.bf16.mxu0 0
      %779 = vmatpush1.bf16.msra.mxu0 0
      %780 = vmatprep.subr.bf16.mxu0 0
      %781 = vmatpush1.bf16.msra.mxu0 0
      %782 = vmatprep.subr.bf16.mxu0 0
      %783 = vmatpush1.bf16.msra.mxu0 0
      %784 = vmatprep.subr.bf16.mxu0 0
      %785 = vmatpush1.bf16.msra.mxu0 0
      %786 = vmatprep.subr.bf16.mxu0 0
      %787 = vmatpush1.bf16.msra.mxu0 0
      %788 = vmatprep.subr.bf16.mxu0 0
      %789 = vmatpush1.bf16.msra.mxu0 0
      %790 = vmatprep.subr.bf16.mxu0 0
      %791 = vmatpush1.bf16.msra.mxu0 0
      %792 = vmatprep.mubr.bf16.mxu0 0
      %793 = vmatmul.mubr.bf16.gmra.mrb[0].mxu0 %v707
      %v794 = vpop.f32.mrb[0].mxu0
      %v795 = vadd.f32 0.0, %v794
      %v796 = vpop.f32.mrb[0].mxu0
      %v797 = vpop.f32.mrb[0].mxu0
      %v798 = vadd.f32 0.0, %v797
      %v799 = vpop.f32.mrb[0].mxu0
      %800 = vmatprep.mubr.bf16.mxu0 0
      %801 = vmatmul.mubr.bf16.gmra.mrb[0].mxu0 %v709
      %v802 = vpop.f32.mrb[0].mxu0
      %v803 = vadd.f32 0.0, %v802
      %v804 = vpop.f32.mrb[0].mxu0
      %v805 = vpop.f32.mrb[0].mxu0
      %v806 = vadd.f32 0.0, %v805
      %v807 = vpop.f32.mrb[0].mxu0
      %808 = vdwg.mxu0
      %v809 = vadd.f32 %v679, %v795
      %v810 = vadd.f32 %v680, %v798
      %v811 = vadd.f32 %v681, %v803
      %v812 = vadd.f32 %v682, %v806
      %v813 = vld [vmem:[%s243] sm:$0xff]
      %v814 = vld [vmem:[%s243 + $0x8] sm:$0xff]
      %v815 = vld [vmem:[%s243 + $0x10] sm:$0xff]
      %v816 = vld [vmem:[%s243 + $0x18] sm:$0xff]
      %818 = vset.pattern.permute.xlu0 0
      %819 = vperm.xlu0 %818, %v813
      %v820 = vpop.permute.xlu0 %819
      %823 = vset.pattern.permute.xlu0 0
      %824 = vperm.xlu0 %823, %v814
      %v825 = vpop.permute.xlu0 %824
      %828 = vset.pattern.permute.xlu0 0
      %829 = vperm.xlu0 %828, %v815
      %v830 = vpop.permute.xlu0 %829
      %833 = vset.pattern.permute.xlu0 0
      %834 = vperm.xlu0 %833, %v816
      %v835 = vpop.permute.xlu0 %834
      %v837 = vmul.f32 %v809, %v820
      %v838 = vmul.f32 %v810, %v825
      %v839 = vmul.f32 %v811, %v830
      %v840 = vmul.f32 %v812, %v835
      %v841 = vadd.f32 %v837, %v838
      %v842 = vadd.f32 %v841, %v839
      %v843 = vadd.f32 %v842, %v840
      %v844 = vrot.slane %v843, 4
      %v845 = vadd.f32 %v843, %v844
      %v846 = vrot.slane %v845, 2
      %v847 = vadd.f32 %v845, %v846
      %v848 = vrot.slane %v847, 1
      %v849 = vadd.f32 %v847, %v848
      %v850 = vmul.f32 %v837, %v837
      %v851 = vmul.f32 %v838, %v838
      %v852 = vmul.f32 %v839, %v839
      %v853 = vmul.f32 %v840, %v840
      %v854 = vadd.f32 %v850, %v851
      %v855 = vadd.f32 %v854, %v852
      %v856 = vadd.f32 %v855, %v853
      %v857 = vrot.slane %v856, 4
      %v858 = vadd.f32 %v856, %v857
      %v859 = vrot.slane %v858, 2
      %v860 = vadd.f32 %v858, %v859
      %v861 = vrot.slane %v860, 1
      %v862 = vadd.f32 %v860, %v861
      %vm863 = vcmask 1040384
      %v864 = vsel %vm863, %v849, %v862
      %865 = vst [vmem:[%s261] sm:$0x3] %v864
      %v866 = vpack.c.bf16 %v810, %v809
      %v867 = vpack.c.bf16 %v812, %v811
      %v870 = vunpack.c.l.b16 %v866
      %v871 = vunpack.c.h.b16 %v866
      %v872 = vunpack.c.l.b16 %v867
      %v873 = vunpack.c.h.b16 %v867
      %v874 = vpack.c.b16 %v870, %v870
      %v875 = vpack.c.b16 %v871, %v871
      %v876 = vpack.c.b16 %v872, %v872
      %v877 = vpack.c.b16 %v873, %v873
      %882 = vst [vmem:[%s253] sm:$0xf] %v874
      %883 = vst [vmem:[%s253 + $0x4] sm:$0xf] %v875
      %884 = vst [vmem:[%s253 + $0x8] sm:$0xf] %v876
      %885 = vst [vmem:[%s253 + $0xc] sm:$0xf] %v877
      %s886 = smul.u32 4, %s21
      %p887 = scmp.lt.s32.totalorder %s20, 1
      %s888 = scalar_select %p887, %s20, 1
      %p889 = scmp.lt.s32.totalorder %s886, 3
      %s890 = scalar_select %p889, %s886, 3
      %s891 = smul.addr %s888, 4
      %s892 = sadd.s32 %s890, %s891
      %s893 = smul.addr %s892, 4
      %s894 = scalar_lea.vmem %s3, %s893
      %p895 = scmp.lt.s32.totalorder %s20, 1
      %s896 = scalar_select %p895, %s20, 1
      %p897 = scmp.lt.s32.totalorder %s21, 0
      %s898 = scalar_select %p897, %s21, 0
      %s899 = sadd.s32 %s898, %s896
      %s900 = smul.addr %s899, 2
      %s901 = scalar_lea.vmem %s4, %s900
      // Predicated region
      $region33: #{discriminator_forward.4} parent=31 // pred_check
        %p902 = pneg %p121
      $region34: #{discriminator_forward.4} parent=31 // pred_check_branch
        %904 = sbr.rel (%p902) target = $region36
      $region35: #{discriminator_forward.4} parent=31 // pred_region
        %s905 = smul.u32 4, %s21
      $region36: #{discriminator_forward.4} parent=31 // pred_fallthru
        _
      // Predicated region
      $region37: #{discriminator_forward.4} parent=31 // pred_check
        %p906 = pneg %p149
      $region38: #{discriminator_forward.4} parent=31 // pred_check_branch
        %908 = sbr.rel (%p906) target = $region40
      $region39: #{discriminator_forward.4} parent=31 // pred_region
        _
      $region40: #{discriminator_forward.4} parent=31 // pred_fallthru
        _
    $region32: #{discriminator_forward.4} parent=5 // pred_fallthru
      _
    %p909 = scmp.le.s32.totalorder 2, %s11
    // Predicated region
    $region41: #{discriminator_forward.4} parent=5 // pred_check
      %p910 = pneg %p909
    $region42: #{discriminator_forward.4} parent=5 // pred_check_branch
      %912 = sbr.rel (%p910) target = $region44
    $region43: #{discriminator_forward.4} parent=5 // pred_region
      %s913 = ssub.s32 %s11, 2
      // Predicated region
      $region45: #{discriminator_forward.4} parent=43 // pred_check
        %p914 = pneg %p127
      $region46: #{discriminator_forward.4} parent=43 // pred_check_branch
        %916 = sbr.rel (%p914) target = $region48
      $region47: #{discriminator_forward.4} parent=43 // pred_region
        %s917 = smul.u32 4, %s23
        %p918 = scmp.lt.s32.totalorder %s22, 1
        %s919 = scalar_select %p918, %s22, 1
        %p920 = scmp.lt.s32.totalorder %s917, 3
        %s921 = scalar_select %p920, %s917, 3
        %s922 = smul.addr %s919, 4
        %s923 = sadd.s32 %s921, %s922
        %s924 = smul.addr %s923, 4
        %s925 = scalar_lea.vmem %s3, %s924
      $region48: #{discriminator_forward.4} parent=43 // pred_fallthru
        _
      // Predicated region
      $region49: #{discriminator_forward.4} parent=43 // pred_check
        %p926 = pneg %p155
      $region50: #{discriminator_forward.4} parent=43 // pred_check_branch
        %928 = sbr.rel (%p926) target = $region52
      $region51: #{discriminator_forward.4} parent=43 // pred_region
        %p929 = scmp.lt.s32.totalorder %s22, 1
        %s930 = scalar_select %p929, %s22, 1
        %p931 = scmp.lt.s32.totalorder %s23, 0
        %s932 = scalar_select %p931, %s23, 0
        %s933 = sadd.s32 %s932, %s930
        %s934 = smul.addr %s933, 2
        %s935 = scalar_lea.vmem %s4, %s934
      $region52: #{discriminator_forward.4} parent=43 // pred_fallthru
        _
    $region44: #{discriminator_forward.4} parent=5 // pred_fallthru
      _
  $region6: #{discriminator_forward.4} parent=0 // loop_footer
    %s15 = sadd.s32 1, %s11
  $region7: #{discriminator_forward.4} parent=0 // loop_footer_branch
    %10 = sbr.rel target = $region3
  $region8: #{discriminator_forward.4} parent=0 // loop_exit
    _

// kernel: discriminator_forward.5
$region0: #{discriminator_forward.5}
  #allocation0 [shape = 'u32[]', space=smem, size = 0x4, offset = 0x4, fixed_abs, tag = 'smem constant byte address 0x4 - core index']
  #allocation1 [shape = 'u32[144,128]{1,0:T(1,128)}', space=vmem, size = 0x12000, scoped, tag = 'internal scratch']
  %s0 = inlined_call_operand.vmem [shape: bf16[2,21,256], index: 0, kind: input, shape index: {}]
  %s1 = inlined_call_operand.vmem [shape: bf16[4,256,128], index: 1, kind: input, shape index: {}]
  %s2 = inlined_call_operand.vmem [shape: f32[16,1], index: 2, kind: input, shape index: {}]
  %s3 = inlined_call_operand.vmem [shape: bf16[2,16,128], index: 3, kind: output, shape index: {0}]
  %s4 = inlined_call_operand.vmem [shape: f32[2,1,2,128], index: 4, kind: output, shape index: {1}]
  %5 = xla_tuple %s3, %s4
  %s6 = sld [smem:[#allocation0]]
  $region53: #{discriminator_forward.5} parent=0
    _
  %s8 = ssub.s32 1, %s6
  %s9 = scalar_select 0, %s8, %s6
  loop: start=0, step=1, limit=4
  $region2: #{discriminator_forward.5} parent=0 // loop_pre_header
    _
  $region3: #{discriminator_forward.5} parent=0 // loop_header
    %s11 = sphi 0, %s15
    %p12 = scmp.ge.s32.totalorder %s11, 4
    %s18 = sphi 0, %s30
    %s19 = sphi 0, %s26
    %s20 = sphi 0, %s18
    %s21 = sphi 0, %s19
    %s22 = sphi 0, %s20
    %s23 = sphi 0, %s21
    %s33 = sphi 0, %s35
    %s36 = sphi 0, %s33
    %s37 = sphi 0, %s36
    %s53 = sphi 0, %s37
    %s57 = sphi 0, %s57
    %s59 = sphi 0, %s57
    %s60 = sphi 0, %s59
    %s74 = sphi 0, %s60
    %s80 = sphi 0, %s82
    %s83 = sphi 0, %s80
    %s84 = sphi 0, %s83
    %s100 = sphi 0, %s84
    %s108 = sphi 0, %s110
    %s111 = sphi 0, %s108
    %s112 = sphi 0, %s111
    %s128 = sphi 0, %s112
    %s136 = sphi 0, %s138
    %s139 = sphi 0, %s136
    %s140 = sphi 0, %s139
    %s156 = sphi 0, %s140
  $region4: #{discriminator_forward.5} parent=0 // loop_header_branch
    %14 = sbr.rel (%p12) target = $region8
  $region5: #{discriminator_forward.5} parent=0 // loop_body
    %s16 = ssub.s32 %s11, 1
    %s17 = ssub.s32 %s11, 2
    %s24 = sadd.s32 1, %s19
    %p25 = scmp.ge.s32.totalorder %s24, 1
    %s26 = scalar_select %p25, 0, %s24
    %s27 = sadd.s32 1, %s18
    %s28 = scalar_select %p25, %s27, %s18
    %p29 = scmp.ge.s32.totalorder %s28, 2
    %s30 = scalar_select %p29, 0, %s28
    %s31 = ssub.s32 %s18, %s30
    %p32 = scmp.eq.s32.totalorder %s31, 0
    %s34 = sadd.s32 %s33, 1
    %s35 = scalar_select %p32, %s33, %s34
    %p38 = pneg %p32
    %p39 = scmp.eq.s32.totalorder %s11, 1
    %p40 = por %p38, %p39
    %p41 = scmp.ne.s32.totalorder %s33, %s36
    %p42 = scmp.eq.s32.totalorder %s11, 0
    %p43 = por %p41, %p42
    %p44 = scmp.ne.s32.totalorder %s33, %s36
    %p45 = scmp.eq.s32.totalorder %s16, 1
    %p46 = por %p44, %p45
    %p47 = scmp.ne.s32.totalorder %s36, %s37
    %p48 = scmp.eq.s32.totalorder %s16, 0
    %p49 = por %p47, %p48
    %p50 = scmp.ne.s32.totalorder %s36, %s37
    %p51 = scmp.eq.s32.totalorder %s17, 1
    %p52 = por %p50, %p51
    %p54 = scmp.ne.s32.totalorder %s37, %s53
    %p55 = scmp.eq.s32.totalorder %s17, 0
    %p56 = por %p54, %p55
    %s58 = sadd.s32 %s57, 1
    %p61 = scmp.eq.s32.totalorder %s11, 1
    %p62 = scmp.ne.s32.totalorder %s57, %s59
    %p63 = scmp.eq.s32.totalorder %s11, 0
    %p64 = por %p62, %p63
    %p65 = scmp.ne.s32.totalorder %s57, %s59
    %p66 = scmp.eq.s32.totalorder %s16, 1
    %p67 = por %p65, %p66
    %p68 = scmp.ne.s32.totalorder %s59, %s60
    %p69 = scmp.eq.s32.totalorder %s16, 0
    %p70 = por %p68, %p69
    %p71 = scmp.ne.s32.totalorder %s59, %s60
    %p72 = scmp.eq.s32.totalorder %s17, 1
    %p73 = por %p71, %p72
    %p75 = scmp.ne.s32.totalorder %s60, %s74
    %p76 = scmp.eq.s32.totalorder %s17, 0
    %p77 = por %p75, %p76
    %s78 = ssub.s32 %s19, %s26
    %p79 = scmp.eq.s32.totalorder %s78, 0
    %s81 = sadd.s32 %s80, 1
    %s82 = scalar_select %p79, %s80, %s81
    %p85 = pneg %p79
    %p86 = scmp.eq.s32.totalorder %s11, 1
    %p87 = por %p85, %p86
    %p88 = scmp.ne.s32.totalorder %s80, %s83
    %p89 = scmp.eq.s32.totalorder %s11, 0
    %p90 = por %p88, %p89
    %p91 = scmp.ne.s32.totalorder %s80, %s83
    %p92 = scmp.eq.s32.totalorder %s16, 1
    %p93 = por %p91, %p92
    %p94 = scmp.ne.s32.totalorder %s83, %s84
    %p95 = scmp.eq.s32.totalorder %s16, 0
    %p96 = por %p94, %p95
    %p97 = scmp.ne.s32.totalorder %s83, %s84
    %p98 = scmp.eq.s32.totalorder %s17, 1
    %p99 = por %p97, %p98
    %p101 = scmp.ne.s32.totalorder %s84, %s100
    %p102 = scmp.eq.s32.totalorder %s17, 0
    %p103 = por %p101, %p102
    %s104 = ssub.s32 %s18, %s30
    %s105 = ssub.s32 %s19, %s26
    %s106 = sor.u32 %s104, %s105
    %p107 = scmp.eq.s32.totalorder %s106, 0
    %s109 = sadd.s32 %s108, 1
    %s110 = scalar_select %p107, %s108, %s109
    %p113 = pneg %p107
    %p114 = scmp.eq.s32.totalorder %s11, 1
    %p115 = por %p113, %p114
    %p116 = scmp.ne.s32.totalorder %s108, %s111
    %p117 = scmp.eq.s32.totalorder %s11, 0
    %p118 = por %p116, %p117
    %p119 = scmp.ne.s32.totalorder %s108, %s111
    %p120 = scmp.eq.s32.totalorder %s16, 1
    %p121 = por %p119, %p120
    %p122 = scmp.ne.s32.totalorder %s111, %s112
    %p123 = scmp.eq.s32.totalorder %s16, 0
    %p124 = por %p122, %p123
    %p125 = scmp.ne.s32.totalorder %s111, %s112
    %p126 = scmp.eq.s32.totalorder %s17, 1
    %p127 = por %p125, %p126
    %p129 = scmp.ne.s32.totalorder %s112, %s128
    %p130 = scmp.eq.s32.totalorder %s17, 0
    %p131 = por %p129, %p130
    %s132 = ssub.s32 %s18, %s30
    %s133 = ssub.s32 %s19, %s26
    %s134 = sor.u32 %s132, %s133
    %p135 = scmp.eq.s32.totalorder %s134, 0
    %s137 = sadd.s32 %s136, 1
    %s138 = scalar_select %p135, %s136, %s137
    %p141 = pneg %p135
    %p142 = scmp.eq.s32.totalorder %s11, 1
    %p143 = por %p141, %p142
    %p144 = scmp.ne.s32.totalorder %s136, %s139
    %p145 = scmp.eq.s32.totalorder %s11, 0
    %p146 = por %p144, %p145
    %p147 = scmp.ne.s32.totalorder %s136, %s139
    %p148 = scmp.eq.s32.totalorder %s16, 1
    %p149 = por %p147, %p148
    %p150 = scmp.ne.s32.totalorder %s139, %s140
    %p151 = scmp.eq.s32.totalorder %s16, 0
    %p152 = por %p150, %p151
    %p153 = scmp.ne.s32.totalorder %s139, %s140
    %p154 = scmp.eq.s32.totalorder %s17, 1
    %p155 = por %p153, %p154
    %p157 = scmp.ne.s32.totalorder %s140, %s156
    %p158 = scmp.eq.s32.totalorder %s17, 0
    %p159 = por %p157, %p158
    %p160 = scmp.le.s32.totalorder 1, %s11
    %p161 = scmp.lt.s32.totalorder %s11, 3
    %p162 = pnand %p160, %p161
    %p163 = pneg %p162
    // Predicated region
    $region9: #{discriminator_forward.5} parent=5 // pred_check
      _
    $region10: #{discriminator_forward.5} parent=5 // pred_check_branch
      %165 = sbr.rel (%p162) target = $region12
    $region11: #{discriminator_forward.5} parent=5 // pred_region
      %s166 = ssub.s32 %s11, 1
      // Predicated region
      $region13: #{discriminator_forward.5} parent=11 // pred_check
        %p167 = pneg %p70
      $region14: #{discriminator_forward.5} parent=11 // pred_check_branch
        %169 = sbr.rel (%p167) target = $region16
      $region15: #{discriminator_forward.5} parent=11 // pred_region
        _
      $region16: #{discriminator_forward.5} parent=11 // pred_fallthru
        _
      // Predicated region
      $region17: #{discriminator_forward.5} parent=11 // pred_check
        %p170 = pneg %p96
      $region18: #{discriminator_forward.5} parent=11 // pred_check_branch
        %172 = sbr.rel (%p170) target = $region20
      $region19: #{discriminator_forward.5} parent=11 // pred_region
        %s173 = smul.u32 2, %s21
        %p174 = scmp.lt.s32.totalorder %s173, 1
        %s175 = scalar_select %p174, %s173, 1
        %s176 = smul.addr %s175, 8
        %s177 = scalar_lea.vmem %s2, %s176
        %s178 = smul.u32 2, %s21
      $region20: #{discriminator_forward.5} parent=11 // pred_fallthru
        _
    $region12: #{discriminator_forward.5} parent=5 // pred_fallthru
      _
    %p179 = scmp.lt.s32.totalorder %s11, 2
    // Predicated region
    $region21: #{discriminator_forward.5} parent=5 // pred_check
      %p180 = pneg %p179
    $region22: #{discriminator_forward.5} parent=5 // pred_check_branch
      %182 = sbr.rel (%p180) target = $region24
    $region23: #{discriminator_forward.5} parent=5 // pred_region
      // Predicated region
      $region25: #{discriminator_forward.5} parent=23 // pred_check
        %p183 = pneg %p43
      $region26: #{discriminator_forward.5} parent=23 // pred_check_branch
        %185 = sbr.rel (%p183) target = $region28
      $region27: #{discriminator_forward.5} parent=23 // pred_region
        %p186 = scmp.lt.s32.totalorder %s18, 1
        %s187 = scalar_select %p186, %s18, 1
        %s188 = smul.addr %s187, 6
        %s189 = smul.addr %s188, 4
        %s190 = scalar_lea.vmem %s0, %s189
      $region28: #{discriminator_forward.5} parent=23 // pred_fallthru
        _
    $region24: #{discriminator_forward.5} parent=5 // pred_fallthru
      _
    %p191 = scmp.le.s32.totalorder 1, %s11
    %p192 = scmp.lt.s32.totalorder %s11, 3
    %p193 = pnand %p191, %p192
    %p194 = pneg %p193
    // Predicated region
    $region29: #{discriminator_forward.5} parent=5 // pred_check
      _
    $region30: #{discriminator_forward.5} parent=5 // pred_check_branch
      %196 = sbr.rel (%p193) target = $region32
    $region31: #{discriminator_forward.5} parent=5 // pred_region
      %s197 = ssub.s32 %s11, 1
      %p198 = scmp.lt.s32.totalorder %s20, 1
      %s199 = scalar_select %p198, %s20, 1
      %s200 = smul.addr %s199, 6
      %s201 = smul.addr %s200, 4
      %s202 = scalar_lea.vmem %s0, %s201
      %p203 = pneg %p49
      %p204 = pneg %p46
      %p205 = pneg %p70
      %p206 = pneg %p67
      %s207 = smul.u32 2, %s21
      %p208 = scmp.lt.s32.totalorder %s207, 1
      %s209 = scalar_select %p208, %s207, 1
      %s210 = smul.addr %s209, 8
      %s211 = scalar_lea.vmem %s2, %s210
      %p212 = pneg %p96
      %p213 = pneg %p93
      %p214 = pneg %p124
      %p215 = pneg %p121
      %s216 = smul.u32 2, %s21
      %p217 = scmp.lt.s32.totalorder %s20, 1
      %s218 = scalar_select %p217, %s20, 1
      %p219 = scmp.lt.s32.totalorder %s216, 1
      %s220 = scalar_select %p219, %s216, 1
      %s221 = smul.addr %s218, 2
      %s222 = sadd.s32 %s220, %s221
      %s223 = smul.addr %s222, 4
      %s224 = scalar_lea.vmem %s3, %s223
      %p225 = pneg %p152
      %p226 = pneg %p149
      %p227 = scmp.lt.s32.totalorder %s20, 1
      %s228 = scalar_select %p227, %s20, 1
      %p229 = scmp.lt.s32.totalorder %s21, 0
      %s230 = scalar_select %p229, %s21, 0
      %s231 = sadd.s32 %s230, %s228
      %s232 = smul.addr %s231, 2
      %s233 = scalar_lea.vmem %s4, %s232
      %p234 = scmp.lt.s32.totalorder %s20, 1
      %s235 = scalar_select %p234, %s20, 1
      %s236 = smul.addr %s235, 6
      %s237 = smul.addr %s236, 4
      %s238 = scalar_lea.vmem %s0, %s237
      %s239 = smul.u32 2, %s21
      %p240 = scmp.lt.s32.totalorder %s239, 1
      %s241 = scalar_select %p240, %s239, 1
      %s242 = smul.addr %s241, 8
      %s243 = scalar_lea.vmem %s2, %s242
      %s244 = smul.u32 2, %s21
      %s245 = smul.u32 2, %s21
      %p246 = scmp.lt.s32.totalorder %s20, 1
      %s247 = scalar_select %p246, %s20, 1
      %p248 = scmp.lt.s32.totalorder %s245, 1
      %s249 = scalar_select %p248, %s245, 1
      %s250 = smul.addr %s247, 2
      %s251 = sadd.s32 %s249, %s250
      %s252 = smul.addr %s251, 4
      %s253 = scalar_lea.vmem %s3, %s252
      %s254 = smul.u32 2, %s21
      %p255 = scmp.lt.s32.totalorder %s20, 1
      %s256 = scalar_select %p255, %s20, 1
      %p257 = scmp.lt.s32.totalorder %s21, 0
      %s258 = scalar_select %p257, %s21, 0
      %s259 = sadd.s32 %s258, %s256
      %s260 = smul.addr %s259, 2
      %s261 = scalar_lea.vmem %s4, %s260
      %v263 = vld [vmem:[%s238] sm:$0xff]
      %v264 = vld [vmem:[%s238 + $0x8] sm:$0xff]
      %v265 = vld [vmem:[%s1] sm:$0xf]
      %v266 = vld [vmem:[%s1 + $0x4] sm:$0xf]
      %v267 = vld [vmem:[%s1 + $0x8] sm:$0xf]
      %v268 = vld [vmem:[%s1 + $0xc] sm:$0xf]
      %v269 = vld [vmem:[%s1 + $0x10] sm:$0xf]
      %v270 = vld [vmem:[%s1 + $0x14] sm:$0xf]
      %v271 = vld [vmem:[%s1 + $0x18] sm:$0xf]
      %v272 = vld [vmem:[%s1 + $0x1c] sm:$0xf]
      %v273 = vld [vmem:[%s1 + $0x20] sm:$0xf]
      %v274 = vld [vmem:[%s1 + $0x24] sm:$0xf]
      %v275 = vld [vmem:[%s1 + $0x28] sm:$0xf]
      %v276 = vld [vmem:[%s1 + $0x2c] sm:$0xf]
      %v277 = vld [vmem:[%s1 + $0x30] sm:$0xf]
      %v278 = vld [vmem:[%s1 + $0x34] sm:$0xf]
      %v279 = vld [vmem:[%s1 + $0x38] sm:$0xf]
      %v280 = vld [vmem:[%s1 + $0x3c] sm:$0xf]
      %v281 = vld [vmem:[%s1 + $0x40] sm:$0xf]
      %v282 = vld [vmem:[%s1 + $0x44] sm:$0xf]
      %v283 = vld [vmem:[%s1 + $0x48] sm:$0xf]
      %v284 = vld [vmem:[%s1 + $0x4c] sm:$0xf]
      %v285 = vld [vmem:[%s1 + $0x50] sm:$0xf]
      %v286 = vld [vmem:[%s1 + $0x54] sm:$0xf]
      %v287 = vld [vmem:[%s1 + $0x58] sm:$0xf]
      %v288 = vld [vmem:[%s1 + $0x5c] sm:$0xf]
      %v289 = vld [vmem:[%s1 + $0x60] sm:$0xf]
      %v290 = vld [vmem:[%s1 + $0x64] sm:$0xf]
      %v291 = vld [vmem:[%s1 + $0x68] sm:$0xf]
      %v292 = vld [vmem:[%s1 + $0x6c] sm:$0xf]
      %v293 = vld [vmem:[%s1 + $0x70] sm:$0xf]
      %v294 = vld [vmem:[%s1 + $0x74] sm:$0xf]
      %v295 = vld [vmem:[%s1 + $0x78] sm:$0xf]
      %v296 = vld [vmem:[%s1 + $0x7c] sm:$0xf]
      %v297 = vld [vmem:[%s238 + $0x10] sm:$0x11]
      %s298 = scalar_lea.vmem %s1, 128
      %v299 = vld [vmem:[%s298] sm:$0xf]
      %v300 = vld [vmem:[%s298 + $0x4] sm:$0xf]
      %v301 = vld [vmem:[%s298 + $0x8] sm:$0xf]
      %v302 = vld [vmem:[%s298 + $0xc] sm:$0xf]
      %v303 = vld [vmem:[%s298 + $0x10] sm:$0xf]
      %v304 = vld [vmem:[%s298 + $0x14] sm:$0xf]
      %v305 = vld [vmem:[%s298 + $0x18] sm:$0xf]
      %v306 = vld [vmem:[%s298 + $0x1c] sm:$0xf]
      %v307 = vld [vmem:[%s298 + $0x20] sm:$0xf]
      %v308 = vld [vmem:[%s298 + $0x24] sm:$0xf]
      %v309 = vld [vmem:[%s298 + $0x28] sm:$0xf]
      %v310 = vld [vmem:[%s298 + $0x2c] sm:$0xf]
      %v311 = vld [vmem:[%s298 + $0x30] sm:$0xf]
      %v312 = vld [vmem:[%s298 + $0x34] sm:$0xf]
      %v313 = vld [vmem:[%s298 + $0x38] sm:$0xf]
      %v314 = vld [vmem:[%s298 + $0x3c] sm:$0xf]
      %v315 = vld [vmem:[%s298 + $0x40] sm:$0xf]
      %v316 = vld [vmem:[%s298 + $0x44] sm:$0xf]
      %v317 = vld [vmem:[%s298 + $0x48] sm:$0xf]
      %v318 = vld [vmem:[%s298 + $0x4c] sm:$0xf]
      %v319 = vld [vmem:[%s298 + $0x50] sm:$0xf]
      %v320 = vld [vmem:[%s298 + $0x54] sm:$0xf]
      %v321 = vld [vmem:[%s298 + $0x58] sm:$0xf]
      %v322 = vld [vmem:[%s298 + $0x5c] sm:$0xf]
      %v323 = vld [vmem:[%s298 + $0x60] sm:$0xf]
      %v324 = vld [vmem:[%s298 + $0x64] sm:$0xf]
      %v325 = vld [vmem:[%s298 + $0x68] sm:$0xf]
      %v326 = vld [vmem:[%s298 + $0x6c] sm:$0xf]
      %v327 = vld [vmem:[%s298 + $0x70] sm:$0xf]
      %v328 = vld [vmem:[%s298 + $0x74] sm:$0xf]
      %v329 = vld [vmem:[%s298 + $0x78] sm:$0xf]
      %v330 = vld [vmem:[%s298 + $0x7c] sm:$0xf]
      %v334 = vunpack.c.l.b16 %v263
      %v335 = vunpack.c.h.b16 %v263
      %v336 = vunpack.c.l.b16 %v264
      %v337 = vunpack.c.h.b16 %v264
      %v338 = vunpack.c.l.b16 %v297
      %v339 = vunpack.c.h.b16 %v297
      %v340 = vpack.c.b16 %v336, %v334
      %v341 = vpack.c.b16 %v337, %v335
      %v342 = vpack.c.b16 %v338, %v338
      %v343 = vpack.c.b16 %v339, %v339
      %vm344 = vsmask.f32 7424
      %v346 = vshrl.u32 %v340, 16
      %v348 = vshll.u32 %v340, 16
      %v350 = vrot.slane %v348, 1
      %v351 = vor.u32 %v346, %v350
      %v353 = vshll.u32 %v342, 16
      %v355 = vrot.slane %v353, 1
      %v356 = vsel %vm344, %v351, %v355
      %v358 = vshrl.u32 %v341, 16
      %v360 = vshll.u32 %v341, 16
      %v362 = vrot.slane %v360, 1
      %v363 = vor.u32 %v358, %v362
      %v365 = vshll.u32 %v343, 16
      %v367 = vrot.slane %v365, 1
      %v368 = vsel %vm344, %v363, %v367
      %v403 = vunpack.c.l.b16 %v299
      %v404 = vunpack.c.l.b16 %v300
      %v405 = vunpack.c.l.b16 %v301
      %v406 = vunpack.c.l.b16 %v302
      %v407 = vunpack.c.l.b16 %v303
      %v408 = vunpack.c.l.b16 %v304
      %v409 = vunpack.c.l.b16 %v305
      %v410 = vunpack.c.l.b16 %v306
      %v411 = vunpack.c.l.b16 %v307
      %v412 = vunpack.c.l.b16 %v308
      %v413 = vunpack.c.l.b16 %v309
      %v414 = vunpack.c.l.b16 %v310
      %v415 = vunpack.c.l.b16 %v311
      %v416 = vunpack.c.l.b16 %v312
      %v417 = vunpack.c.l.b16 %v313
      %v418 = vunpack.c.l.b16 %v314
      %v419 = vunpack.c.l.b16 %v315
      %v420 = vunpack.c.l.b16 %v316
      %v421 = vunpack.c.l.b16 %v317
      %v422 = vunpack.c.l.b16 %v318
      %v423 = vunpack.c.l.b16 %v319
      %v424 = vunpack.c.l.b16 %v320
      %v425 = vunpack.c.l.b16 %v321
      %v426 = vunpack.c.l.b16 %v322
      %v427 = vunpack.c.l.b16 %v323
      %v428 = vunpack.c.l.b16 %v324
      %v429 = vunpack.c.l.b16 %v325
      %v430 = vunpack.c.l.b16 %v326
      %v431 = vunpack.c.l.b16 %v327
      %v432 = vunpack.c.l.b16 %v328
      %v433 = vunpack.c.l.b16 %v329
      %v434 = vunpack.c.l.b16 %v330
      %v435 = vpack.c.b16 %v404, %v403
      %v436 = vpack.c.b16 %v406, %v405
      %v437 = vpack.c.b16 %v408, %v407
      %v438 = vpack.c.b16 %v410, %v409
      %v439 = vpack.c.b16 %v412, %v411
      %v440 = vpack.c.b16 %v414, %v413
      %v441 = vpack.c.b16 %v416, %v415
      %v442 = vpack.c.b16 %v418, %v417
      %v443 = vpack.c.b16 %v420, %v419
      %v444 = vpack.c.b16 %v422, %v421
      %v445 = vpack.c.b16 %v424, %v423
      %v446 = vpack.c.b16 %v426, %v425
      %v447 = vpack.c.b16 %v428, %v427
      %v448 = vpack.c.b16 %v430, %v429
      %v449 = vpack.c.b16 %v432, %v431
      %v450 = vpack.c.b16 %v434, %v433
      %467 = vmatprep.subr.bf16.mxu0 0
      %468 = vmatpush1.bf16.msra.mxu0 %v435
      %469 = vmatprep.subr.bf16.mxu0 0
      %470 = vmatpush1.bf16.msra.mxu0 %v436
      %471 = vmatprep.subr.bf16.mxu0 0
      %472 = vmatpush1.bf16.msra.mxu0 %v437
      %473 = vmatprep.subr.bf16.mxu0 0
      %474 = vmatpush1.bf16.msra.mxu0 %v438
      %475 = vmatprep.subr.bf16.mxu0 0
      %476 = vmatpush1.bf16.msra.mxu0 %v439
      %477 = vmatprep.subr.bf16.mxu0 0
      %478 = vmatpush1.bf16.msra.mxu0 %v440
      %479 = vmatprep.subr.bf16.mxu0 0
      %480 = vmatpush1.bf16.msra.mxu0 %v441
      %481 = vmatprep.subr.bf16.mxu0 0
      %482 = vmatpush1.bf16.msra.mxu0 %v442
      %483 = vmatprep.subr.bf16.mxu0 0
      %484 = vmatpush1.bf16.msra.mxu0 %v443
      %485 = vmatprep.subr.bf16.mxu0 0
      %486 = vmatpush1.bf16.msra.mxu0 %v444
      %487 = vmatprep.subr.bf16.mxu0 0
      %488 = vmatpush1.bf16.msra.mxu0 %v445
      %489 = vmatprep.subr.bf16.mxu0 0
      %490 = vmatpush1.bf16.msra.mxu0 %v446
      %491 = vmatprep.subr.bf16.mxu0 0
      %492 = vmatpush1.bf16.msra.mxu0 %v447
      %493 = vmatprep.subr.bf16.mxu0 0
      %494 = vmatpush1.bf16.msra.mxu0 %v448
      %495 = vmatprep.subr.bf16.mxu0 0
      %496 = vmatpush1.bf16.msra.mxu0 %v449
      %497 = vmatprep.subr.bf16.mxu0 0
      %498 = vmatpush1.bf16.msra.mxu0 %v450
      %499 = vmatprep.mubr.bf16.mxu0 %v368
      %500 = vmatmul.mubr.bf16.gmra.mrb[0].mxu0 %v356
      %v501 = vpop.f32.mrb[0].mxu0
      %v502 = vadd.f32 0.0, %v501
      %v503 = vpop.f32.mrb[0].mxu0
      %v504 = vpop.f32.mrb[0].mxu0
      %v505 = vadd.f32 0.0, %v504
      %v506 = vpop.f32.mrb[0].mxu0
      %507 = vdwg.mxu0
      %v542 = vunpack.c.l.b16 %v265
      %v543 = vunpack.c.l.b16 %v266
      %v544 = vunpack.c.l.b16 %v267
      %v545 = vunpack.c.l.b16 %v268
      %v546 = vunpack.c.l.b16 %v269
      %v547 = vunpack.c.l.b16 %v270
      %v548 = vunpack.c.l.b16 %v271
      %v549 = vunpack.c.l.b16 %v272
      %v550 = vunpack.c.l.b16 %v273
      %v551 = vunpack.c.l.b16 %v274
      %v552 = vunpack.c.l.b16 %v275
      %v553 = vunpack.c.l.b16 %v276
      %v554 = vunpack.c.l.b16 %v277
      %v555 = vunpack.c.l.b16 %v278
      %v556 = vunpack.c.l.b16 %v279
      %v557 = vunpack.c.l.b16 %v280
      %v558 = vunpack.c.l.b16 %v281
      %v559 = vunpack.c.l.b16 %v282
      %v560 = vunpack.c.l.b16 %v283
      %v561 = vunpack.c.l.b16 %v284
      %v562 = vunpack.c.l.b16 %v285
      %v563 = vunpack.c.l.b16 %v286
      %v564 = vunpack.c.l.b16 %v287
      %v565 = vunpack.c.l.b16 %v288
      %v566 = vunpack.c.l.b16 %v289
      %v567 = vunpack.c.l.b16 %v290
      %v568 = vunpack.c.l.b16 %v291
      %v569 = vunpack.c.l.b16 %v292
      %v570 = vunpack.c.l.b16 %v293
      %v571 = vunpack.c.l.b16 %v294
      %v572 = vunpack.c.l.b16 %v295
      %v573 = vunpack.c.l.b16 %v296
      %v574 = vpack.c.b16 %v543, %v542
      %v575 = vpack.c.b16 %v545, %v544
      %v576 = vpack.c.b16 %v547, %v546
      %v577 = vpack.c.b16 %v549, %v548
      %v578 = vpack.c.b16 %v551, %v550
      %v579 = vpack.c.b16 %v553, %v552
      %v580 = vpack.c.b16 %v555, %v554
      %v581 = vpack.c.b16 %v557, %v556
      %v582 = vpack.c.b16 %v559, %v558
      %v583 = vpack.c.b16 %v561, %v560
      %v584 = vpack.c.b16 %v563, %v562
      %v585 = vpack.c.b16 %v565, %v564
      %v586 = vpack.c.b16 %v567, %v566
      %v587 = vpack.c.b16 %v569, %v568
      %v588 = vpack.c.b16 %v571, %v570
      %v589 = vpack.c.b16 %v573, %v572
      %606 = vmatprep.subr.bf16.mxu0 0
      %607 = vmatpush1.bf16.msra.mxu0 %v574
      %608 = vmatprep.subr.bf16.mxu0 0
      %609 = vmatpush1.bf16.msra.mxu0 %v575
      %610 = vmatprep.subr.bf16.mxu0 0
      %611 = vmatpush1.bf16.msra.mxu0 %v576
      %612 = vmatprep.subr.bf16.mxu0 0
      %613 = vmatpush1.bf16.msra.mxu0 %v577
      %614 = vmatprep.subr.bf16.mxu0 0
      %615 = vmatpush1.bf16.msra.mxu0 %v578
      %616 = vmatprep.subr.bf16.mxu0 0
      %617 = vmatpush1.bf16.msra.mxu0 %v579
      %618 = vmatprep.subr.bf16.mxu0 0
      %619 = vmatpush1.bf16.msra.mxu0 %v580
      %620 = vmatprep.subr.bf16.mxu0 0
      %621 = vmatpush1.bf16.msra.mxu0 %v581
      %622 = vmatprep.subr.bf16.mxu0 0
      %623 = vmatpush1.bf16.msra.mxu0 %v582
      %624 = vmatprep.subr.bf16.mxu0 0
      %625 = vmatpush1.bf16.msra.mxu0 %v583
      %626 = vmatprep.subr.bf16.mxu0 0
      %627 = vmatpush1.bf16.msra.mxu0 %v584
      %628 = vmatprep.subr.bf16.mxu0 0
      %629 = vmatpush1.bf16.msra.mxu0 %v585
      %630 = vmatprep.subr.bf16.mxu0 0
      %631 = vmatpush1.bf16.msra.mxu0 %v586
      %632 = vmatprep.subr.bf16.mxu0 0
      %633 = vmatpush1.bf16.msra.mxu0 %v587
      %634 = vmatprep.subr.bf16.mxu0 0
      %635 = vmatpush1.bf16.msra.mxu0 %v588
      %636 = vmatprep.subr.bf16.mxu0 0
      %637 = vmatpush1.bf16.msra.mxu0 %v589
      %638 = vmatprep.mubr.bf16.mxu0 %v341
      %639 = vmatmul.mubr.bf16.gmra.mrb[0].mxu0 %v340
      %v640 = vpop.f32.mrb[0].mxu0
      %v641 = vadd.f32 %v502, %v640
      %v642 = vpop.f32.mrb[0].mxu0
      %v643 = vpop.f32.mrb[0].mxu0
      %v644 = vadd.f32 %v505, %v643
      %v645 = vpop.f32.mrb[0].mxu0
      %646 = vdwg.mxu0
      %v647 = vld [vmem:[%s238] sm:$0xee]
      %v648 = vld [vmem:[%s238 + $0x10] sm:$0x33]
      %s649 = scalar_lea.vmem %s1, 256
      %v650 = vld [vmem:[%s649] sm:$0xf]
      %v651 = vld [vmem:[%s649 + $0x4] sm:$0xf]
      %v652 = vld [vmem:[%s649 + $0x8] sm:$0xf]
      %v653 = vld [vmem:[%s649 + $0xc] sm:$0xf]
      %v654 = vld [vmem:[%s649 + $0x10] sm:$0xf]
      %v655 = vld [vmem:[%s649 + $0x14] sm:$0xf]
      %v656 = vld [vmem:[%s649 + $0x18] sm:$0xf]
      %v657 = vld [vmem:[%s649 + $0x1c] sm:$0xf]
      %v658 = vld [vmem:[%s649 + $0x20] sm:$0xf]
      %v659 = vld [vmem:[%s649 + $0x24] sm:$0xf]
      %v660 = vld [vmem:[%s649 + $0x28] sm:$0xf]
      %v661 = vld [vmem:[%s649 + $0x2c] sm:$0xf]
      %v662 = vld [vmem:[%s649 + $0x30] sm:$0xf]
      %v663 = vld [vmem:[%s649 + $0x34] sm:$0xf]
      %v664 = vld [vmem:[%s649 + $0x38] sm:$0xf]
      %v665 = vld [vmem:[%s649 + $0x3c] sm:$0xf]
      %v666 = vld [vmem:[%s649 + $0x40] sm:$0xf]
      %v667 = vld [vmem:[%s649 + $0x44] sm:$0xf]
      %v668 = vld [vmem:[%s649 + $0x48] sm:$0xf]
      %v669 = vld [vmem:[%s649 + $0x4c] sm:$0xf]
      %v670 = vld [vmem:[%s649 + $0x50] sm:$0xf]
      %v671 = vld [vmem:[%s649 + $0x54] sm:$0xf]
      %v672 = vld [vmem:[%s649 + $0x58] sm:$0xf]
      %v673 = vld [vmem:[%s649 + $0x5c] sm:$0xf]
      %v674 = vld [vmem:[%s649 + $0x60] sm:$0xf]
      %v675 = vld [vmem:[%s649 + $0x64] sm:$0xf]
      %v676 = vld [vmem:[%s649 + $0x68] sm:$0xf]
      %v677 = vld [vmem:[%s649 + $0x6c] sm:$0xf]
      %v678 = vld [vmem:[%s649 + $0x70] sm:$0xf]
      %v679 = vld [vmem:[%s649 + $0x74] sm:$0xf]
      %v680 = vld [vmem:[%s649 + $0x78] sm:$0xf]
      %v681 = vld [vmem:[%s649 + $0x7c] sm:$0xf]
      %v684 = vunpack.c.l.b16 %v647
      %v685 = vunpack.c.h.b16 %v647
      %v686 = vunpack.c.l.b16 %v648
      %v687 = vunpack.c.h.b16 %v648
      %v688 = vpack.c.b16 %v336, %v684
      %v689 = vpack.c.b16 %v337, %v685
      %v690 = vpack.c.b16 %v686, %v686
      %v691 = vpack.c.b16 %v687, %v687
      %vm692 = vsmask.f32 6400
      %v694 = vshrl.u32 %v688, 16
      %v696 = vrot.slane %v694, 1
      %v697 = vshll.u32 %v688, 16
      %v699 = vrot.slane %v697, 2
      %v700 = vor.u32 %v696, %v699
      %v702 = vshrl.u32 %v690, 16
      %v704 = vrot.slane %v702, 1
      %v705 = vshll.u32 %v690, 16
      %v707 = vrot.slane %v705, 2
      %v708 = vor.u32 %v704, %v707
      %v709 = vsel %vm692, %v700, %v708
      %v711 = vshrl.u32 %v689, 16
      %v713 = vrot.slane %v711, 1
      %v714 = vshll.u32 %v689, 16
      %v716 = vrot.slane %v714, 2
      %v717 = vor.u32 %v713, %v716
      %v719 = vshrl.u32 %v691, 16
      %v721 = vrot.slane %v719, 1
      %v722 = vshll.u32 %v691, 16
      %v724 = vrot.slane %v722, 2
      %v725 = vor.u32 %v721, %v724
      %v726 = vsel %vm692, %v717, %v725
      %v761 = vunpack.c.l.b16 %v650
      %v762 = vunpack.c.l.b16 %v651
      %v763 = vunpack.c.l.b16 %v652
      %v764 = vunpack.c.l.b16 %v653
      %v765 = vunpack.c.l.b16 %v654
      %v766 = vunpack.c.l.b16 %v655
      %v767 = vunpack.c.l.b16 %v656
      %v768 = vunpack.c.l.b16 %v657
      %v769 = vunpack.c.l.b16 %v658
      %v770 = vunpack.c.l.b16 %v659
      %v771 = vunpack.c.l.b16 %v660
      %v772 = vunpack.c.l.b16 %v661
      %v773 = vunpack.c.l.b16 %v662
      %v774 = vunpack.c.l.b16 %v663
      %v775 = vunpack.c.l.b16 %v664
      %v776 = vunpack.c.l.b16 %v665
      %v777 = vunpack.c.l.b16 %v666
      %v778 = vunpack.c.l.b16 %v667
      %v779 = vunpack.c.l.b16 %v668
      %v780 = vunpack.c.l.b16 %v669
      %v781 = vunpack.c.l.b16 %v670
      %v782 = vunpack.c.l.b16 %v671
      %v783 = vunpack.c.l.b16 %v672
      %v784 = vunpack.c.l.b16 %v673
      %v785 = vunpack.c.l.b16 %v674
      %v786 = vunpack.c.l.b16 %v675
      %v787 = vunpack.c.l.b16 %v676
      %v788 = vunpack.c.l.b16 %v677
      %v789 = vunpack.c.l.b16 %v678
      %v790 = vunpack.c.l.b16 %v679
      %v791 = vunpack.c.l.b16 %v680
      %v792 = vunpack.c.l.b16 %v681
      %v793 = vpack.c.b16 %v762, %v761
      %v794 = vpack.c.b16 %v764, %v763
      %v795 = vpack.c.b16 %v766, %v765
      %v796 = vpack.c.b16 %v768, %v767
      %v797 = vpack.c.b16 %v770, %v769
      %v798 = vpack.c.b16 %v772, %v771
      %v799 = vpack.c.b16 %v774, %v773
      %v800 = vpack.c.b16 %v776, %v775
      %v801 = vpack.c.b16 %v778, %v777
      %v802 = vpack.c.b16 %v780, %v779
      %v803 = vpack.c.b16 %v782, %v781
      %v804 = vpack.c.b16 %v784, %v783
      %v805 = vpack.c.b16 %v786, %v785
      %v806 = vpack.c.b16 %v788, %v787
      %v807 = vpack.c.b16 %v790, %v789
      %v808 = vpack.c.b16 %v792, %v791
      %825 = vmatprep.subr.bf16.mxu0 0
      %826 = vmatpush1.bf16.msra.mxu0 %v793
      %827 = vmatprep.subr.bf16.mxu0 0
      %828 = vmatpush1.bf16.msra.mxu0 %v794
      %829 = vmatprep.subr.bf16.mxu0 0
      %830 = vmatpush1.bf16.msra.mxu0 %v795
      %831 = vmatprep.subr.bf16.mxu0 0
      %832 = vmatpush1.bf16.msra.mxu0 %v796
      %833 = vmatprep.subr.bf16.mxu0 0
      %834 = vmatpush1.bf16.msra.mxu0 %v797
      %835 = vmatprep.subr.bf16.mxu0 0
      %836 = vmatpush1.bf16.msra.mxu0 %v798
      %837 = vmatprep.subr.bf16.mxu0 0
      %838 = vmatpush1.bf16.msra.mxu0 %v799
      %839 = vmatprep.subr.bf16.mxu0 0
      %840 = vmatpush1.bf16.msra.mxu0 %v800
      %841 = vmatprep.subr.bf16.mxu0 0
      %842 = vmatpush1.bf16.msra.mxu0 %v801
      %843 = vmatprep.subr.bf16.mxu0 0
      %844 = vmatpush1.bf16.msra.mxu0 %v802
      %845 = vmatprep.subr.bf16.mxu0 0
      %846 = vmatpush1.bf16.msra.mxu0 %v803
      %847 = vmatprep.subr.bf16.mxu0 0
      %848 = vmatpush1.bf16.msra.mxu0 %v804
      %849 = vmatprep.subr.bf16.mxu0 0
      %850 = vmatpush1.bf16.msra.mxu0 %v805
      %851 = vmatprep.subr.bf16.mxu0 0
      %852 = vmatpush1.bf16.msra.mxu0 %v806
      %853 = vmatprep.subr.bf16.mxu0 0
      %854 = vmatpush1.bf16.msra.mxu0 %v807
      %855 = vmatprep.subr.bf16.mxu0 0
      %856 = vmatpush1.bf16.msra.mxu0 %v808
      %857 = vmatprep.mubr.bf16.mxu0 %v726
      %858 = vmatmul.mubr.bf16.gmra.mrb[0].mxu0 %v709
      %v859 = vpop.f32.mrb[0].mxu0
      %v860 = vadd.f32 0.0, %v859
      %v861 = vpop.f32.mrb[0].mxu0
      %v862 = vpop.f32.mrb[0].mxu0
      %v863 = vadd.f32 0.0, %v862
      %v864 = vpop.f32.mrb[0].mxu0
      %865 = vdwg.mxu0
      %v866 = vadd.f32 %v641, %v860
      %v867 = vadd.f32 %v644, %v863
      %v868 = vld [vmem:[%s238] sm:$0xcc]
      %s869 = scalar_lea.vmem %s1, 384
      %v870 = vld [vmem:[%s869] sm:$0xf]
      %v871 = vld [vmem:[%s869 + $0x4] sm:$0xf]
      %v872 = vld [vmem:[%s869 + $0x8] sm:$0xf]
      %v873 = vld [vmem:[%s869 + $0xc] sm:$0xf]
      %v874 = vld [vmem:[%s869 + $0x10] sm:$0xf]
      %v875 = vld [vmem:[%s869 + $0x14] sm:$0xf]
      %v876 = vld [vmem:[%s869 + $0x18] sm:$0xf]
      %v877 = vld [vmem:[%s869 + $0x1c] sm:$0xf]
      %v878 = vld [vmem:[%s869 + $0x20] sm:$0xf]
      %v879 = vld [vmem:[%s869 + $0x24] sm:$0xf]
      %v880 = vld [vmem:[%s869 + $0x28] sm:$0xf]
      %v881 = vld [vmem:[%s869 + $0x2c] sm:$0xf]
      %v882 = vld [vmem:[%s869 + $0x30] sm:$0xf]
      %v883 = vld [vmem:[%s869 + $0x34] sm:$0xf]
      %v884 = vld [vmem:[%s869 + $0x38] sm:$0xf]
      %v885 = vld [vmem:[%s869 + $0x3c] sm:$0xf]
      %v886 = vld [vmem:[%s869 + $0x40] sm:$0xf]
      %v887 = vld [vmem:[%s869 + $0x44] sm:$0xf]
      %v888 = vld [vmem:[%s869 + $0x48] sm:$0xf]
      %v889 = vld [vmem:[%s869 + $0x4c] sm:$0xf]
      %v890 = vld [vmem:[%s869 + $0x50] sm:$0xf]
      %v891 = vld [vmem:[%s869 + $0x54] sm:$0xf]
      %v892 = vld [vmem:[%s869 + $0x58] sm:$0xf]
      %v893 = vld [vmem:[%s869 + $0x5c] sm:$0xf]
      %v894 = vld [vmem:[%s869 + $0x60] sm:$0xf]
      %v895 = vld [vmem:[%s869 + $0x64] sm:$0xf]
      %v896 = vld [vmem:[%s869 + $0x68] sm:$0xf]
      %v897 = vld [vmem:[%s869 + $0x6c] sm:$0xf]
      %v898 = vld [vmem:[%s869 + $0x70] sm:$0xf]
      %v899 = vld [vmem:[%s869 + $0x74] sm:$0xf]
      %v900 = vld [vmem:[%s869 + $0x78] sm:$0xf]
      %v901 = vld [vmem:[%s869 + $0x7c] sm:$0xf]
      %v903 = vunpack.c.l.b16 %v868
      %v904 = vunpack.c.h.b16 %v868
      %v905 = vpack.c.b16 %v336, %v903
      %v906 = vpack.c.b16 %v337, %v904
      %vm907 = vcmask 1045504
      %v908 = vrot.slane %v905, 2
      %v909 = vrot.slane %v690, 2
      %v910 = vsel %vm907, %v908, %v909
      %v911 = vrot.slane %v906, 2
      %v912 = vrot.slane %v691, 2
      %v913 = vsel %vm907, %v911, %v912
      %v948 = vunpack.c.l.b16 %v870
      %v949 = vunpack.c.l.b16 %v871
      %v950 = vunpack.c.l.b16 %v872
      %v951 = vunpack.c.l.b16 %v873
      %v952 = vunpack.c.l.b16 %v874
      %v953 = vunpack.c.l.b16 %v875
      %v954 = vunpack.c.l.b16 %v876
      %v955 = vunpack.c.l.b16 %v877
      %v956 = vunpack.c.l.b16 %v878
      %v957 = vunpack.c.l.b16 %v879
      %v958 = vunpack.c.l.b16 %v880
      %v959 = vunpack.c.l.b16 %v881
      %v960 = vunpack.c.l.b16 %v882
      %v961 = vunpack.c.l.b16 %v883
      %v962 = vunpack.c.l.b16 %v884
      %v963 = vunpack.c.l.b16 %v885
      %v964 = vunpack.c.l.b16 %v886
      %v965 = vunpack.c.l.b16 %v887
      %v966 = vunpack.c.l.b16 %v888
      %v967 = vunpack.c.l.b16 %v889
      %v968 = vunpack.c.l.b16 %v890
      %v969 = vunpack.c.l.b16 %v891
      %v970 = vunpack.c.l.b16 %v892
      %v971 = vunpack.c.l.b16 %v893
      %v972 = vunpack.c.l.b16 %v894
      %v973 = vunpack.c.l.b16 %v895
      %v974 = vunpack.c.l.b16 %v896
      %v975 = vunpack.c.l.b16 %v897
      %v976 = vunpack.c.l.b16 %v898
      %v977 = vunpack.c.l.b16 %v899
      %v978 = vunpack.c.l.b16 %v900
      %v979 = vunpack.c.l.b16 %v901
      %v980 = vpack.c.b16 %v949, %v948
      %v981 = vpack.c.b16 %v951, %v950
      %v982 = vpack.c.b16 %v953, %v952
      %v983 = vpack.c.b16 %v955, %v954
      %v984 = vpack.c.b16 %v957, %v956
      %v985 = vpack.c.b16 %v959, %v958
      %v986 = vpack.c.b16 %v961, %v960
      %v987 = vpack.c.b16 %v963, %v962
      %v988 = vpack.c.b16 %v965, %v964
      %v989 = vpack.c.b16 %v967, %v966
      %v990 = vpack.c.b16 %v969, %v968
      %v991 = vpack.c.b16 %v971, %v970
      %v992 = vpack.c.b16 %v973, %v972
      %v993 = vpack.c.b16 %v975, %v974
      %v994 = vpack.c.b16 %v977, %v976
      %v995 = vpack.c.b16 %v979, %v978
      %1012 = vmatprep.subr.bf16.mxu0 0
      %1013 = vmatpush1.bf16.msra.mxu0 %v980
      %1014 = vmatprep.subr.bf16.mxu0 0
      %1015 = vmatpush1.bf16.msra.mxu0 %v981
      %1016 = vmatprep.subr.bf16.mxu0 0
      %1017 = vmatpush1.bf16.msra.mxu0 %v982
      %1018 = vmatprep.subr.bf16.mxu0 0
      %1019 = vmatpush1.bf16.msra.mxu0 %v983
      %1020 = vmatprep.subr.bf16.mxu0 0
      %1021 = vmatpush1.bf16.msra.mxu0 %v984
      %1022 = vmatprep.subr.bf16.mxu0 0
      %1023 = vmatpush1.bf16.msra.mxu0 %v985
      %1024 = vmatprep.subr.bf16.mxu0 0
      %1025 = vmatpush1.bf16.msra.mxu0 %v986
      %1026 = vmatprep.subr.bf16.mxu0 0
      %1027 = vmatpush1.bf16.msra.mxu0 %v987
      %1028 = vmatprep.subr.bf16.mxu0 0
      %1029 = vmatpush1.bf16.msra.mxu0 %v988
      %1030 = vmatprep.subr.bf16.mxu0 0
      %1031 = vmatpush1.bf16.msra.mxu0 %v989
      %1032 = vmatprep.subr.bf16.mxu0 0
      %1033 = vmatpush1.bf16.msra.mxu0 %v990
      %1034 = vmatprep.subr.bf16.mxu0 0
      %1035 = vmatpush1.bf16.msra.mxu0 %v991
      %1036 = vmatprep.subr.bf16.mxu0 0
      %1037 = vmatpush1.bf16.msra.mxu0 %v992
      %1038 = vmatprep.subr.bf16.mxu0 0
      %1039 = vmatpush1.bf16.msra.mxu0 %v993
      %1040 = vmatprep.subr.bf16.mxu0 0
      %1041 = vmatpush1.bf16.msra.mxu0 %v994
      %1042 = vmatprep.subr.bf16.mxu0 0
      %1043 = vmatpush1.bf16.msra.mxu0 %v995
      %1044 = vmatprep.mubr.bf16.mxu0 %v913
      %1045 = vmatmul.mubr.bf16.gmra.mrb[0].mxu0 %v910
      %v1046 = vpop.f32.mrb[0].mxu0
      %v1047 = vadd.f32 0.0, %v1046
      %v1048 = vpop.f32.mrb[0].mxu0
      %v1049 = vpop.f32.mrb[0].mxu0
      %v1050 = vadd.f32 0.0, %v1049
      %v1051 = vpop.f32.mrb[0].mxu0
      %1052 = vdwg.mxu0
      %v1053 = vadd.f32 %v866, %v1047
      %v1054 = vadd.f32 %v867, %v1050
      %v1055 = vld [vmem:[%s243] sm:$0xff]
      %v1056 = vld [vmem:[%s243 + $0x8] sm:$0xff]
      %1058 = vset.pattern.permute.xlu0 0
      %1059 = vperm.xlu0 %1058, %v1055
      %v1060 = vpop.permute.xlu0 %1059
      %1063 = vset.pattern.permute.xlu0 0
      %1064 = vperm.xlu0 %1063, %v1056
      %v1065 = vpop.permute.xlu0 %1064
      %v1067 = vmul.f32 %v1053, %v1060
      %v1068 = vmul.f32 %v1054, %v1065
      %v1069 = vadd.f32 %v1067, %v1068
      %v1070 = vrot.slane %v1069, 4
      %v1071 = vadd.f32 %v1069, %v1070
      %v1072 = vrot.slane %v1071, 2
      %v1073 = vadd.f32 %v1071, %v1072
      %v1074 = vrot.slane %v1073, 1
      %v1075 = vadd.f32 %v1073, %v1074
      %v1076 = vmul.f32 %v1067, %v1067
      %v1077 = vmul.f32 %v1068, %v1068
      %v1078 = vadd.f32 %v1076, %v1077
      %v1079 = vrot.slane %v1078, 4
      %v1080 = vadd.f32 %v1078, %v1079
      %v1081 = vrot.slane %v1080, 2
      %v1082 = vadd.f32 %v1080, %v1081
      %v1083 = vrot.slane %v1082, 1
      %v1084 = vadd.f32 %v1082, %v1083
      %vm1085 = vcmask 1040384
      %v1086 = vsel %vm1085, %v1075, %v1084
      %1087 = vst [vmem:[%s261] sm:$0x3] %v1086
      %v1088 = vpack.c.bf16 %v1054, %v1053
      %v1090 = vunpack.c.l.b16 %v1088
      %v1091 = vunpack.c.h.b16 %v1088
      %v1092 = vpack.c.b16 %v1090, %v1090
      %v1093 = vpack.c.b16 %v1091, %v1091
      %1096 = vst [vmem:[%s253] sm:$0xf] %v1092
      %1097 = vst [vmem:[%s253 + $0x4] sm:$0xf] %v1093
      %s1098 = smul.u32 2, %s21
      %p1099 = scmp.lt.s32.totalorder %s20, 1
      %s1100 = scalar_select %p1099, %s20, 1
      %p1101 = scmp.lt.s32.totalorder %s1098, 1
      %s1102 = scalar_select %p1101, %s1098, 1
      %s1103 = smul.addr %s1100, 2
      %s1104 = sadd.s32 %s1102, %s1103
      %s1105 = smul.addr %s1104, 4
      %s1106 = scalar_lea.vmem %s3, %s1105
      %p1107 = scmp.lt.s32.totalorder %s20, 1
      %s1108 = scalar_select %p1107, %s20, 1
      %p1109 = scmp.lt.s32.totalorder %s21, 0
      %s1110 = scalar_select %p1109, %s21, 0
      %s1111 = sadd.s32 %s1110, %s1108
      %s1112 = smul.addr %s1111, 2
      %s1113 = scalar_lea.vmem %s4, %s1112
      // Predicated region
      $region33: #{discriminator_forward.5} parent=31 // pred_check
        %p1114 = pneg %p121
      $region34: #{discriminator_forward.5} parent=31 // pred_check_branch
        %1116 = sbr.rel (%p1114) target = $region36
      $region35: #{discriminator_forward.5} parent=31 // pred_region
        %s1117 = smul.u32 2, %s21
      $region36: #{discriminator_forward.5} parent=31 // pred_fallthru
        _
      // Predicated region
      $region37: #{discriminator_forward.5} parent=31 // pred_check
        %p1118 = pneg %p149
      $region38: #{discriminator_forward.5} parent=31 // pred_check_branch
        %1120 = sbr.rel (%p1118) target = $region40
      $region39: #{discriminator_forward.5} parent=31 // pred_region
        _
      $region40: #{discriminator_forward.5} parent=31 // pred_fallthru
        _
    $region32: #{discriminator_forward.5} parent=5 // pred_fallthru
      _
    %p1121 = scmp.le.s32.totalorder 2, %s11
    // Predicated region
    $region41: #{discriminator_forward.5} parent=5 // pred_check
      %p1122 = pneg %p1121
    $region42: #{discriminator_forward.5} parent=5 // pred_check_branch
      %1124 = sbr.rel (%p1122) target = $region44
    $region43: #{discriminator_forward.5} parent=5 // pred_region
      %s1125 = ssub.s32 %s11, 2
      // Predicated region
      $region45: #{discriminator_forward.5} parent=43 // pred_check
        %p1126 = pneg %p127
      $region46: #{discriminator_forward.5} parent=43 // pred_check_branch
        %1128 = sbr.rel (%p1126) target = $region48
      $region47: #{discriminator_forward.5} parent=43 // pred_region
        %s1129 = smul.u32 2, %s23
        %p1130 = scmp.lt.s32.totalorder %s22, 1
        %s1131 = scalar_select %p1130, %s22, 1
        %p1132 = scmp.lt.s32.totalorder %s1129, 1
        %s1133 = scalar_select %p1132, %s1129, 1
        %s1134 = smul.addr %s1131, 2
        %s1135 = sadd.s32 %s1133, %s1134
        %s1136 = smul.addr %s1135, 4
        %s1137 = scalar_lea.vmem %s3, %s1136
      $region48: #{discriminator_forward.5} parent=43 // pred_fallthru
        _
      // Predicated region
      $region49: #{discriminator_forward.5} parent=43 // pred_check
        %p1138 = pneg %p155
      $region50: #{discriminator_forward.5} parent=43 // pred_check_branch
        %1140 = sbr.rel (%p1138) target = $region52
      $region51: #{discriminator_forward.5} parent=43 // pred_region
        %p1141 = scmp.lt.s32.totalorder %s22, 1
        %s1142 = scalar_select %p1141, %s22, 1
        %p1143 = scmp.lt.s32.totalorder %s23, 0
        %s1144 = scalar_select %p1143, %s23, 0
        %s1145 = sadd.s32 %s1144, %s1142
        %s1146 = smul.addr %s1145, 2
        %s1147 = scalar_lea.vmem %s4, %s1146
      $region52: #{discriminator_forward.5} parent=43 // pred_fallthru
        _
    $region44: #{discriminator_forward.5} parent=5 // pred_fallthru
      _
  $region6: #{discriminator_forward.5} parent=0 // loop_footer
    %s15 = sadd.s32 1, %s11
  $region7: #{discriminator_forward.5} parent=0 // loop_footer_branch
    %10 = sbr.rel target = $region3
  $region8: #{discriminator_forward.5} parent=0 // loop_exit
    _

</llo_original>
